<compile_context>
chip_gen: v7x
topology: tpu7x:2x2x1
jax: 0.10.0
libtpu: 0.0.40
codegen_flags: <defaults>
</compile_context>

<pallas_src>
import jax
import jax.numpy as jnp
from jax import lax
from jax.experimental import pallas as pl
from jax.experimental.pallas import tpu as pltpu


# ----------------------------------------------------------------------------
# Kernel
# ----------------------------------------------------------------------------
def _attn_decoder_gru_kernel(
    x_ref,          # (B, I)
    h_ref,          # (num_layers, B, H)     previous hidden state
    enc_ref,        # (B*L, H)               encoder outputs, flattened
    w_x_ref,        # (I, B*L + H)           [tiled attn-x | combine-x]
    b_attn_ref,     # (1, B*L)               tiled attention bias
    w_attn_h_ref,   # (H, B*L)               tiled attention h-weights
    w_comb_h_ref,   # (H, H)
    b_comb_ref,     # (1, H)
    w_gates_ref,    # (num_layers, 2H, 3H)   [w_ih^T ; w_hh^T]
    b_gates_ref,    # (num_layers, 1, 3H)    b_ih + b_hh
    w_hh_n_ref,     # (num_layers, H, H)     w_hh^T n-slice
    b_hh_n_ref,     # (num_layers, 1, H)     b_hh n-slice
    w_fc_ref,       # (1, H)
    b_fc_ref,       # (1, 1)
    out_ref,        # (B, 1)
    dec_h_ref,      # (num_layers, B, H)
    attn_w_ref,     # (B, L)
):
    B = x_ref.shape[0]
    H = h_ref.shape[-1]
    num_layers = w_gates_ref.shape[0]
    BL = b_attn_ref.shape[-1]      # B * history_length (tiled width)
    L = attn_w_ref.shape[-1]       # history_length

    x = x_ref[...]                 # (B, I)
    h0 = h_ref[0]                  # (B, H)

    # ---- fused x projection: [attention-x (tiled) | combine-x] ----
    x_proj = jnp.dot(x, w_x_ref[...], preferred_element_type=jnp.float32)   # (B, BL+H)

    # ---- attention logits at tiled width: logits_t[b, c] = logits[b, c % L] ----
    logits_t = (x_proj[:, :BL]
                + jnp.dot(h0, w_attn_h_ref[...], preferred_element_type=jnp.float32)
                + b_attn_ref[...])                                           # (B, BL)
    comb_x = x_proj[:, BL:]                                                  # (B, H)

    # ---- softmax over the first period (the true (B, L) logits) ----
    logits = logits_t[:, :L]
    m = jnp.max(logits, axis=-1, keepdims=True)
    e = jnp.exp(logits - m)
    denom = jnp.sum(e, axis=-1, keepdims=True)
    attn_w = e / denom
    attn_w_ref[...] = attn_w                                                 # (B, L)

    # ---- block-diagonal softmax matrix: row b nonzero on [b*L, (b+1)*L) ----
    col = lax.broadcasted_iota(jnp.int32, (B, BL), 1)
    row = lax.broadcasted_iota(jnp.int32, (B, BL), 0)
    lo = row * L
    mask = (col >= lo) & (col < lo + L)
    attn_bd = jnp.where(mask, jnp.exp(logits_t - m), 0.0) / denom            # (B, BL)

    # ---- context = block-diag(attn) @ enc_flat   (MXU, replaces VPU reduce) ----
    context = jnp.dot(attn_bd, enc_ref[...], preferred_element_type=jnp.float32)  # (B, H)

    # ---- attn_combine + ReLU ----
    h_in = jnp.maximum(
        comb_x
        + jnp.dot(context, w_comb_h_ref[...], preferred_element_type=jnp.float32)
        + b_comb_ref[...],
        0.0)                                                                  # (B, H)

    # ---- single-step multi-layer GRU, K-fused gate matmuls ----
    for layer in range(num_layers):
        h_prev = h_ref[layer]                                                 # (B, H)
        hh = jnp.concatenate([h_in, h_prev], axis=-1)                         # (B, 2H)
        gates = (jnp.dot(hh, w_gates_ref[layer],
                         preferred_element_type=jnp.float32)
                 + b_gates_ref[layer])                                        # (B, 3H) = gi + gh
        r = jax.nn.sigmoid(gates[:, 0 * H:1 * H])
        z = jax.nn.sigmoid(gates[:, 1 * H:2 * H])
        gh_n = (jnp.dot(h_prev, w_hh_n_ref[layer],
                        preferred_element_type=jnp.float32)
                + b_hh_n_ref[layer])                                          # (B, H)
        # gi_n + r*gh_n == (gi_n + gh_n) + (r - 1)*gh_n
        n = jnp.tanh(gates[:, 2 * H:3 * H] + (r - 1.0) * gh_n)
        h_new = (1.0 - z) * n + z * h_prev
        dec_h_ref[layer] = h_new
        h_in = h_new

    # ---- fc + ReLU (N == 1 -> VPU multiply + lane reduce) ----
    out = jnp.sum(h_in * w_fc_ref[...], axis=-1, keepdims=True) + b_fc_ref[...]
    out_ref[...] = jnp.maximum(out, 0.0)


# ----------------------------------------------------------------------------
# One-time weight preprocessing (cache the result; do NOT redo per decode step)
# ----------------------------------------------------------------------------
def prepare_params(params, batch):
    """Pack nn.Module-shaped params into the kernel-ready layout for a given batch."""
    w_attn, b_attn = params["attention"]      # (L, I+H), (L,)
    w_comb, b_comb = params["attn_combine"]   # (H, I+H), (H,)
    w_fc, b_fc = params["fc"]                 # (1, H),   (1,)
    L = w_attn.shape[0]
    H = w_comb.shape[0]
    I = w_attn.shape[1] - H
    B = batch

    w_attn_x = jnp.asarray(w_attn[:, :I].T, jnp.float32)            # (I, L)
    w_attn_h = jnp.asarray(w_attn[:, I:].T, jnp.float32)            # (H, L)
    # Tile along N so attention logits come out directly at block-diag width B*L.
    w_attn_x_t = jnp.tile(w_attn_x, (1, B))                         # (I, B*L)
    w_attn_h_t = jnp.tile(w_attn_h, (1, B))                         # (H, B*L)
    b_attn_t = jnp.tile(jnp.asarray(b_attn, jnp.float32)[None, :], (1, B))  # (1, B*L)

    w_comb_x = jnp.asarray(w_comb[:, :I].T, jnp.float32)            # (I, H)
    w_comb_h = jnp.asarray(w_comb[:, I:].T, jnp.float32)            # (H, H)

    # Fused x-projection weight: [tiled attention-x | combine-x].
    w_x = jnp.concatenate([w_attn_x_t, w_comb_x], axis=1)           # (I, B*L + H)

    w_gates, b_gates, w_hh_n, b_hh_n = [], [], [], []
    for (wi, wh, bi, bh) in params["gru"]:
        wiT = jnp.asarray(wi.T, jnp.float32)                        # (H, 3H)
        whT = jnp.asarray(wh.T, jnp.float32)                        # (H, 3H)
        w_gates.append(jnp.concatenate([wiT, whT], axis=0))         # (2H, 3H)
        b_gates.append(jnp.asarray(bi + bh, jnp.float32)[None, :])  # (1, 3H)
        w_hh_n.append(whT[:, 2 * H:3 * H])                          # (H, H)
        b_hh_n.append(jnp.asarray(bh, jnp.float32)[None, 2 * H:3 * H])  # (1, H)

    packed = dict(
        w_x=w_x,
        b_attn=b_attn_t,
        w_attn_h=w_attn_h_t,
        w_comb_h=w_comb_h,
        b_comb=jnp.asarray(b_comb, jnp.float32)[None, :],
        w_gates=jnp.stack(w_gates, 0),
        b_gates=jnp.stack(b_gates, 0),
        w_hh_n=jnp.stack(w_hh_n, 0),
        b_hh_n=jnp.stack(b_hh_n, 0),
        w_fc=jnp.asarray(w_fc, jnp.float32),
        b_fc=jnp.asarray(b_fc, jnp.float32)[None, :],
    )
    return jax.tree_util.tree_map(jax.block_until_ready, packed)


# ----------------------------------------------------------------------------
# Per-step forward: exactly one pallas_call (plus a free reshape of enc)
# ----------------------------------------------------------------------------
@jax.jit
def attn_decoder_gru_forward(X, hidden_state, encoder_outputs, packed):
    """Mirrors AttnDecoderGRU.forward(X, hidden_state, encoder_outputs).

    X:                (batch, input_size)
    hidden_state:     (num_layers, batch, hidden)
    encoder_outputs:  (batch, history_length, hidden)
    returns (out (batch, 1), decoder_hidden (num_layers, batch, hidden),
             attn_weights (batch, history_length))
    """
    B = X.shape[0]
    num_layers, _, H = hidden_state.shape
    L = encoder_outputs.shape[1]
    enc_flat = encoder_outputs.astype(jnp.float32).reshape(B * L, H)

    inputs = (
        X.astype(jnp.float32),
        hidden_state.astype(jnp.float32),
        enc_flat,
        packed["w_x"], packed["b_attn"], packed["w_attn_h"],
        packed["w_comb_h"], packed["b_comb"],
        packed["w_gates"], packed["b_gates"],
        packed["w_hh_n"], packed["b_hh_n"],
        packed["w_fc"], packed["b_fc"],
    )

    vspec = pl.BlockSpec(memory_space=pltpu.MemorySpace.VMEM)
    out_shape = (
        jax.ShapeDtypeStruct((B, 1), jnp.float32),
        jax.ShapeDtypeStruct((num_layers, B, H), jnp.float32),
        jax.ShapeDtypeStruct((B, L), jnp.float32),
    )

    out, dec_h, attn_w = pl.pallas_call(
        _attn_decoder_gru_kernel,
        in_specs=[vspec] * len(inputs),
        out_specs=(vspec, vspec, vspec),
        out_shape=out_shape,
    )(*inputs)
    return out, dec_h, attn_w


# ----------------------------------------------------------------------------
# Parameter init matching the nn.Module parameter shapes
# ----------------------------------------------------------------------------
def init_params(key, input_size, hidden_size, num_layers, history_length):
    def uni(k, shape, bound):
        return jax.random.uniform(k, shape, jnp.float32, -bound, bound)

    params = {}
    key, k1, k2, k3, k4, k5, k6 = jax.random.split(key, 7)
    b_in = 1.0 / float(jnp.sqrt(hidden_size + input_size))
    params["attention"] = (
        uni(k1, (history_length, hidden_size + input_size), b_in),
        uni(k2, (history_length,), b_in),
    )
    params["attn_combine"] = (
        uni(k3, (hidden_size, hidden_size + input_size), b_in),
        uni(k4, (hidden_size,), b_in),
    )
    b_fc = 1.0 / float(jnp.sqrt(hidden_size))
    params["fc"] = (uni(k5, (1, hidden_size), b_fc), uni(k6, (1,), b_fc))

    gru = []
    kg = 1.0 / float(jnp.sqrt(hidden_size))
    for _ in range(num_layers):
        key, ka, kb, kc, kd = jax.random.split(key, 5)
        gru.append((
            uni(ka, (3 * hidden_size, hidden_size), kg),   # weight_ih (GRU input = hidden)
            uni(kb, (3 * hidden_size, hidden_size), kg),   # weight_hh
            uni(kc, (3 * hidden_size,), kg),               # bias_ih
            uni(kd, (3 * hidden_size,), kg),               # bias_hh
        ))
    params["gru"] = gru
    return params


# --- pure-JAX reference (same math as the PyTorch module), for correctness ---
def _ref_forward(X, hidden_state, encoder_outputs, params):
    w_attn, b_attn = params["attention"]
    w_comb, b_comb = params["attn_combine"]
    w_fc, b_fc = params["fc"]
    H = hidden_state.shape[-1]

    h0 = hidden_state[0]
    attn_in = jnp.concatenate([X, h0], axis=1)
    attn_w = jax.nn.softmax(attn_in @ w_attn.T + b_attn, axis=-1)
    context = jnp.einsum("bl,blh->bh", attn_w, encoder_outputs)
    comb_in = jnp.concatenate([X, context], axis=1)
    h_in = jax.nn.relu(comb_in @ w_comb.T + b_comb)

    dec_h = []
    for layer, (w_ih, w_hh, b_ih, b_hh) in enumerate(params["gru"]):
        h_prev = hidden_state[layer]
        gi = h_in @ w_ih.T + b_ih
        gh = h_prev @ w_hh.T + b_hh
        r = jax.nn.sigmoid(gi[:, 0 * H:1 * H] + gh[:, 0 * H:1 * H])
        z = jax.nn.sigmoid(gi[:, 1 * H:2 * H] + gh[:, 1 * H:2 * H])
        n = jnp.tanh(gi[:, 2 * H:3 * H] + r * gh[:, 2 * H:3 * H])
        h_new = (1.0 - z) * n + z * h_prev
        dec_h.append(h_new)
        h_in = h_new

    out = jax.nn.relu(h_in @ w_fc.T + b_fc)
    return out, jnp.stack(dec_h, 0), attn_w


if __name__ == "__main__":
    batch = 8
    input_size = 4
    hidden_size = 128
    num_layers = 2
    history_length = 16

    key = jax.random.PRNGKey(0)
    key, kx, kh, ke = jax.random.split(key, 4)
    X = jax.random.normal(kx, (batch, input_size), jnp.float32)
    hidden_state = jax.random.normal(kh, (num_layers, batch, hidden_size), jnp.float32)
    encoder_outputs = jax.random.normal(
        ke, (batch, history_length, hidden_size), jnp.float32)

    params = init_params(key, input_size, hidden_size, num_layers, history_length)

    # One-time, cached weight packing (NOT repeated per decode step).
    packed = prepare_params(params, batch)

    out, dec_h, attn_w = attn_decoder_gru_forward(
        X, hidden_state, encoder_outputs, packed)
    out = jax.block_until_ready(out)
    dec_h = jax.block_until_ready(dec_h)
    attn_w = jax.block_until_ready(attn_w)

    assert out.shape == (batch, 1)
    assert dec_h.shape == (num_layers, batch, hidden_size)
    assert attn_w.shape == (batch, history_length)

    ref_out, ref_h, ref_w = _ref_forward(X, hidden_state, encoder_outputs, params)
    assert jnp.allclose(out, ref_out, atol=1e-4, rtol=1e-4)
    assert jnp.allclose(dec_h, ref_h, atol=1e-4, rtol=1e-4)
    assert jnp.allclose(attn_w, ref_w, atol=1e-4, rtol=1e-4)

    # Second (autoregressive-style) step reusing the cached packed weights:
    out2, dec_h2, attn_w2 = attn_decoder_gru_forward(
        out @ jnp.zeros((1, input_size), jnp.float32) + X, dec_h, encoder_outputs, packed)
    jax.block_until_ready(out2)

    print("KERNEL_OK")
</pallas_src>

<mosaic_0001>
module attributes {stable_mosaic.version = 11 : i64} {
  func.func @_attn_decoder_gru_kernel(%arg0: memref<8x4xf32, #tpu.memory_space<vmem>>, %arg1: memref<2x8x128xf32, #tpu.memory_space<vmem>>, %arg2: memref<128x128xf32, #tpu.memory_space<vmem>>, %arg3: memref<4x256xf32, #tpu.memory_space<vmem>>, %arg4: memref<1x128xf32, #tpu.memory_space<vmem>>, %arg5: memref<128x128xf32, #tpu.memory_space<vmem>>, %arg6: memref<128x128xf32, #tpu.memory_space<vmem>>, %arg7: memref<1x128xf32, #tpu.memory_space<vmem>>, %arg8: memref<2x256x384xf32, #tpu.memory_space<vmem>>, %arg9: memref<2x1x384xf32, #tpu.memory_space<vmem>>, %arg10: memref<2x128x128xf32, #tpu.memory_space<vmem>>, %arg11: memref<2x1x128xf32, #tpu.memory_space<vmem>>, %arg12: memref<1x128xf32, #tpu.memory_space<vmem>>, %arg13: memref<1x1xf32, #tpu.memory_space<vmem>>, %arg14: memref<8x1xf32, #tpu.memory_space<vmem>>, %arg15: memref<2x8x128xf32, #tpu.memory_space<vmem>>, %arg16: memref<8x16xf32, #tpu.memory_space<vmem>>) attributes {dimension_semantics = [], scalar_prefetch = 0 : i64, scratch_operands = 0 : i64, tpu.core_type = #tpu.core_type<tc>} {
    %c0 = arith.constant 0 : index
    %c0_0 = arith.constant 0 : index
    %0 = vector.load %arg0[%c0, %c0_0] : memref<8x4xf32, #tpu.memory_space<vmem>>, vector<8x4xf32>
    %c0_1 = arith.constant 0 : index
    %c0_2 = arith.constant 0 : index
    %c0_3 = arith.constant 0 : index
    %1 = vector.load %arg1[%c0_1, %c0_2, %c0_3] : memref<2x8x128xf32, #tpu.memory_space<vmem>>, vector<1x8x128xf32>
    %2 = vector.shape_cast %1 : vector<1x8x128xf32> to vector<8x128xf32>
    %c0_4 = arith.constant 0 : index
    %c0_5 = arith.constant 0 : index
    %3 = vector.load %arg3[%c0_4, %c0_5] : memref<4x256xf32, #tpu.memory_space<vmem>>, vector<4x256xf32>
    %cst = arith.constant dense<0.000000e+00> : vector<8x256xf32>
    %4 = tpu.matmul %0, %3, %cst {dimension_numbers = #tpu.dot_dimension_numbers<[1], [0], [0], [1], [0, 0, 1, 1], [], []>} : vector<8x4xf32>, vector<4x256xf32>, vector<8x256xf32> -> vector<8x256xf32>
    %5 = vector.extract_strided_slice %4 {offsets = [0, 0], sizes = [8, 128], strides = [1, 1]} : vector<8x256xf32> to vector<8x128xf32>
    %c0_6 = arith.constant 0 : index
    %c0_7 = arith.constant 0 : index
    %6 = vector.load %arg5[%c0_6, %c0_7] : memref<128x128xf32, #tpu.memory_space<vmem>>, vector<128x128xf32>
    %cst_8 = arith.constant dense<0.000000e+00> : vector<8x128xf32>
    %7 = tpu.matmul %2, %6, %cst_8 {dimension_numbers = #tpu.dot_dimension_numbers<[1], [0], [0], [1], [0, 0, 1, 1], [], []>} : vector<8x128xf32>, vector<128x128xf32>, vector<8x128xf32> -> vector<8x128xf32>
    %8 = arith.addf %5, %7 : vector<8x128xf32>
    %c0_9 = arith.constant 0 : index
    %c0_10 = arith.constant 0 : index
    %9 = vector.load %arg4[%c0_9, %c0_10] : memref<1x128xf32, #tpu.memory_space<vmem>>, vector<1x128xf32>
    %10 = vector.broadcast %9 : vector<1x128xf32> to vector<8x128xf32>
    %11 = arith.addf %8, %10 : vector<8x128xf32>
    %12 = vector.extract_strided_slice %4 {offsets = [0, 128], sizes = [8, 128], strides = [1, 1]} : vector<8x256xf32> to vector<8x128xf32>
    %13 = vector.extract_strided_slice %11 {offsets = [0, 0], sizes = [8, 16], strides = [1, 1]} : vector<8x128xf32> to vector<8x16xf32>
    %cst_11 = arith.constant dense<0xFF800000> : vector<8xf32>
    %14 = vector.multi_reduction <maximumf>, %13, %cst_11 [1] : vector<8x16xf32> to vector<8xf32>
    %15 = vector.shape_cast %14 : vector<8xf32> to vector<8x1xf32>
    %16 = vector.broadcast %15 : vector<8x1xf32> to vector<8x16xf32>
    %17 = arith.subf %13, %16 : vector<8x16xf32>
    %18 = math.exp %17 : vector<8x16xf32>
    %cst_12 = arith.constant dense<0.000000e+00> : vector<8xf32>
    %19 = vector.multi_reduction <add>, %18, %cst_12 [1] : vector<8x16xf32> to vector<8xf32>
    %20 = vector.shape_cast %19 : vector<8xf32> to vector<8x1xf32>
    %21 = vector.broadcast %20 : vector<8x1xf32> to vector<8x16xf32>
    %22 = arith.divf %18, %21 : vector<8x16xf32>
    %c0_13 = arith.constant 0 : index
    %c0_14 = arith.constant 0 : index
    %23 = vector.load %arg16[%c0_13, %c0_14] : memref<8x16xf32, #tpu.memory_space<vmem>>, vector<8x16xf32>
    tpu.vector_store %arg16[%c0_13, %c0_14], %22 {strides = array<i32>} : memref<8x16xf32, #tpu.memory_space<vmem>>, vector<8x16xf32>,
    %24 = tpu.iota {dimensions = array<i32: 1>} : vector<8x128xi32>
    %25 = tpu.iota {dimensions = array<i32: 0>} : vector<8x128xi32>
    %c16_i32 = arith.constant 16 : i32
    %26 = vector.broadcast %c16_i32 : i32 to vector<8x128xi32>
    %27 = arith.muli %25, %26 : vector<8x128xi32>
    %28 = arith.cmpi sge, %24, %27 : vector<8x128xi32>
    %c16_i32_15 = arith.constant 16 : i32
    %29 = vector.broadcast %c16_i32_15 : i32 to vector<8x128xi32>
    %30 = arith.addi %27, %29 : vector<8x128xi32>
    %31 = arith.cmpi slt, %24, %30 : vector<8x128xi32>
    %32 = arith.andi %28, %31 : vector<8x128xi1>
    %33 = vector.broadcast %15 : vector<8x1xf32> to vector<8x128xf32>
    %34 = arith.subf %11, %33 : vector<8x128xf32>
    %35 = math.exp %34 : vector<8x128xf32>
    %cst_16 = arith.constant 0.000000e+00 : f32
    %36 = vector.broadcast %cst_16 : f32 to vector<8x128xf32>
    %37 = arith.select %32, %35, %36 : vector<8x128xi1>, vector<8x128xf32>
    %38 = vector.broadcast %20 : vector<8x1xf32> to vector<8x128xf32>
    %39 = arith.divf %37, %38 : vector<8x128xf32>
    %c0_17 = arith.constant 0 : index
    %c0_18 = arith.constant 0 : index
    %40 = vector.load %arg2[%c0_17, %c0_18] : memref<128x128xf32, #tpu.memory_space<vmem>>, vector<128x128xf32>
    %cst_19 = arith.constant dense<0.000000e+00> : vector<8x128xf32>
    %41 = tpu.matmul %39, %40, %cst_19 {dimension_numbers = #tpu.dot_dimension_numbers<[1], [0], [0], [1], [0, 0, 1, 1], [], []>} : vector<8x128xf32>, vector<128x128xf32>, vector<8x128xf32> -> vector<8x128xf32>
    %c0_20 = arith.constant 0 : index
    %c0_21 = arith.constant 0 : index
    %42 = vector.load %arg6[%c0_20, %c0_21] : memref<128x128xf32, #tpu.memory_space<vmem>>, vector<128x128xf32>
    %cst_22 = arith.constant dense<0.000000e+00> : vector<8x128xf32>
    %43 = tpu.matmul %41, %42, %cst_22 {dimension_numbers = #tpu.dot_dimension_numbers<[1], [0], [0], [1], [0, 0, 1, 1], [], []>} : vector<8x128xf32>, vector<128x128xf32>, vector<8x128xf32> -> vector<8x128xf32>
    %44 = arith.addf %12, %43 : vector<8x128xf32>
    %c0_23 = arith.constant 0 : index
    %c0_24 = arith.constant 0 : index
    %45 = vector.load %arg7[%c0_23, %c0_24] : memref<1x128xf32, #tpu.memory_space<vmem>>, vector<1x128xf32>
    %46 = vector.broadcast %45 : vector<1x128xf32> to vector<8x128xf32>
    %47 = arith.addf %44, %46 : vector<8x128xf32>
    %cst_25 = arith.constant 0.000000e+00 : f32
    %48 = vector.broadcast %cst_25 : f32 to vector<8x128xf32>
    %49 = arith.maximumf %47, %48 : vector<8x128xf32>
    %c0_26 = arith.constant 0 : index
    %c0_27 = arith.constant 0 : index
    %c0_28 = arith.constant 0 : index
    %50 = vector.load %arg1[%c0_26, %c0_27, %c0_28] : memref<2x8x128xf32, #tpu.memory_space<vmem>>, vector<1x8x128xf32>
    %51 = vector.shape_cast %50 : vector<1x8x128xf32> to vector<8x128xf32>
    %52 = tpu.concatenate %49, %51 in 1 : vector<8x128xf32>, vector<8x128xf32> -> vector<8x256xf32>
    %c0_29 = arith.constant 0 : index
    %c0_30 = arith.constant 0 : index
    %c0_31 = arith.constant 0 : index
    %53 = vector.load %arg8[%c0_29, %c0_30, %c0_31] : memref<2x256x384xf32, #tpu.memory_space<vmem>>, vector<1x256x384xf32>
    %54 = vector.shape_cast %53 : vector<1x256x384xf32> to vector<256x384xf32>
    %cst_32 = arith.constant dense<0.000000e+00> : vector<8x384xf32>
    %55 = tpu.matmul %52, %54, %cst_32 {dimension_numbers = #tpu.dot_dimension_numbers<[1], [0], [0], [1], [0, 0, 1, 1], [], []>} : vector<8x256xf32>, vector<256x384xf32>, vector<8x384xf32> -> vector<8x384xf32>
    %c0_33 = arith.constant 0 : index
    %c0_34 = arith.constant 0 : index
    %c0_35 = arith.constant 0 : index
    %56 = vector.load %arg9[%c0_33, %c0_34, %c0_35] : memref<2x1x384xf32, #tpu.memory_space<vmem>>, vector<1x1x384xf32>
    %57 = vector.shape_cast %56 : vector<1x1x384xf32> to vector<1x384xf32>
    %58 = vector.broadcast %57 : vector<1x384xf32> to vector<8x384xf32>
    %59 = arith.addf %55, %58 : vector<8x384xf32>
    %60 = vector.extract_strided_slice %59 {offsets = [0, 0], sizes = [8, 128], strides = [1, 1]} : vector<8x384xf32> to vector<8x128xf32>
    %61 = arith.negf %60 : vector<8x128xf32>
    %62 = math.exp %61 : vector<8x128xf32>
    %cst_36 = arith.constant 1.000000e+00 : f32
    %63 = vector.broadcast %cst_36 : f32 to vector<8x128xf32>
    %64 = arith.addf %63, %62 : vector<8x128xf32>
    %65 = arith.divf %63, %64 : vector<8x128xf32>
    %66 = vector.extract_strided_slice %59 {offsets = [0, 128], sizes = [8, 128], strides = [1, 1]} : vector<8x384xf32> to vector<8x128xf32>
    %67 = arith.negf %66 : vector<8x128xf32>
    %68 = math.exp %67 : vector<8x128xf32>
    %cst_37 = arith.constant 1.000000e+00 : f32
    %69 = vector.broadcast %cst_37 : f32 to vector<8x128xf32>
    %70 = arith.addf %69, %68 : vector<8x128xf32>
    %71 = arith.divf %69, %70 : vector<8x128xf32>
    %c0_38 = arith.constant 0 : index
    %c0_39 = arith.constant 0 : index
    %c0_40 = arith.constant 0 : index
    %72 = vector.load %arg10[%c0_38, %c0_39, %c0_40] : memref<2x128x128xf32, #tpu.memory_space<vmem>>, vector<1x128x128xf32>
    %73 = vector.shape_cast %72 : vector<1x128x128xf32> to vector<128x128xf32>
    %cst_41 = arith.constant dense<0.000000e+00> : vector<8x128xf32>
    %74 = tpu.matmul %51, %73, %cst_41 {dimension_numbers = #tpu.dot_dimension_numbers<[1], [0], [0], [1], [0, 0, 1, 1], [], []>} : vector<8x128xf32>, vector<128x128xf32>, vector<8x128xf32> -> vector<8x128xf32>
    %c0_42 = arith.constant 0 : index
    %c0_43 = arith.constant 0 : index
    %c0_44 = arith.constant 0 : index
    %75 = vector.load %arg11[%c0_42, %c0_43, %c0_44] : memref<2x1x128xf32, #tpu.memory_space<vmem>>, vector<1x1x128xf32>
    %76 = vector.shape_cast %75 : vector<1x1x128xf32> to vector<1x128xf32>
    %77 = vector.broadcast %76 : vector<1x128xf32> to vector<8x128xf32>
    %78 = arith.addf %74, %77 : vector<8x128xf32>
    %79 = vector.extract_strided_slice %59 {offsets = [0, 256], sizes = [8, 128], strides = [1, 1]} : vector<8x384xf32> to vector<8x128xf32>
    %cst_45 = arith.constant 1.000000e+00 : f32
    %80 = vector.broadcast %cst_45 : f32 to vector<8x128xf32>
    %81 = arith.subf %65, %80 : vector<8x128xf32>
    %82 = arith.mulf %81, %78 : vector<8x128xf32>
    %83 = arith.addf %79, %82 : vector<8x128xf32>
    %84 = math.tanh %83 : vector<8x128xf32>
    %cst_46 = arith.constant 1.000000e+00 : f32
    %85 = vector.broadcast %cst_46 : f32 to vector<8x128xf32>
    %86 = arith.subf %85, %71 : vector<8x128xf32>
    %87 = arith.mulf %86, %84 : vector<8x128xf32>
    %88 = arith.mulf %71, %51 : vector<8x128xf32>
    %89 = arith.addf %87, %88 : vector<8x128xf32>
    %c0_47 = arith.constant 0 : index
    %c0_48 = arith.constant 0 : index
    %c0_49 = arith.constant 0 : index
    %90 = vector.load %arg15[%c0_47, %c0_48, %c0_49] : memref<2x8x128xf32, #tpu.memory_space<vmem>>, vector<1x8x128xf32>
    %91 = vector.shape_cast %90 : vector<1x8x128xf32> to vector<8x128xf32>
    %92 = vector.shape_cast %89 : vector<8x128xf32> to vector<1x8x128xf32>
    tpu.vector_store %arg15[%c0_47, %c0_48, %c0_49], %92 {strides = array<i32>} : memref<2x8x128xf32, #tpu.memory_space<vmem>>, vector<1x8x128xf32>,
    %c1 = arith.constant 1 : index
    %c0_50 = arith.constant 0 : index
    %c0_51 = arith.constant 0 : index
    %93 = vector.load %arg1[%c1, %c0_50, %c0_51] : memref<2x8x128xf32, #tpu.memory_space<vmem>>, vector<1x8x128xf32>
    %94 = vector.shape_cast %93 : vector<1x8x128xf32> to vector<8x128xf32>
    %95 = tpu.concatenate %89, %94 in 1 : vector<8x128xf32>, vector<8x128xf32> -> vector<8x256xf32>
    %c1_52 = arith.constant 1 : index
    %c0_53 = arith.constant 0 : index
    %c0_54 = arith.constant 0 : index
    %96 = vector.load %arg8[%c1_52, %c0_53, %c0_54] : memref<2x256x384xf32, #tpu.memory_space<vmem>>, vector<1x256x384xf32>
    %97 = vector.shape_cast %96 : vector<1x256x384xf32> to vector<256x384xf32>
    %cst_55 = arith.constant dense<0.000000e+00> : vector<8x384xf32>
    %98 = tpu.matmul %95, %97, %cst_55 {dimension_numbers = #tpu.dot_dimension_numbers<[1], [0], [0], [1], [0, 0, 1, 1], [], []>} : vector<8x256xf32>, vector<256x384xf32>, vector<8x384xf32> -> vector<8x384xf32>
    %c1_56 = arith.constant 1 : index
    %c0_57 = arith.constant 0 : index
    %c0_58 = arith.constant 0 : index
    %99 = vector.load %arg9[%c1_56, %c0_57, %c0_58] : memref<2x1x384xf32, #tpu.memory_space<vmem>>, vector<1x1x384xf32>
    %100 = vector.shape_cast %99 : vector<1x1x384xf32> to vector<1x384xf32>
    %101 = vector.broadcast %100 : vector<1x384xf32> to vector<8x384xf32>
    %102 = arith.addf %98, %101 : vector<8x384xf32>
    %103 = vector.extract_strided_slice %102 {offsets = [0, 0], sizes = [8, 128], strides = [1, 1]} : vector<8x384xf32> to vector<8x128xf32>
    %104 = arith.negf %103 : vector<8x128xf32>
    %105 = math.exp %104 : vector<8x128xf32>
    %cst_59 = arith.constant 1.000000e+00 : f32
    %106 = vector.broadcast %cst_59 : f32 to vector<8x128xf32>
    %107 = arith.addf %106, %105 : vector<8x128xf32>
    %108 = arith.divf %106, %107 : vector<8x128xf32>
    %109 = vector.extract_strided_slice %102 {offsets = [0, 128], sizes = [8, 128], strides = [1, 1]} : vector<8x384xf32> to vector<8x128xf32>
    %110 = arith.negf %109 : vector<8x128xf32>
    %111 = math.exp %110 : vector<8x128xf32>
    %cst_60 = arith.constant 1.000000e+00 : f32
    %112 = vector.broadcast %cst_60 : f32 to vector<8x128xf32>
    %113 = arith.addf %112, %111 : vector<8x128xf32>
    %114 = arith.divf %112, %113 : vector<8x128xf32>
    %c1_61 = arith.constant 1 : index
    %c0_62 = arith.constant 0 : index
    %c0_63 = arith.constant 0 : index
    %115 = vector.load %arg10[%c1_61, %c0_62, %c0_63] : memref<2x128x128xf32, #tpu.memory_space<vmem>>, vector<1x128x128xf32>
    %116 = vector.shape_cast %115 : vector<1x128x128xf32> to vector<128x128xf32>
    %cst_64 = arith.constant dense<0.000000e+00> : vector<8x128xf32>
    %117 = tpu.matmul %94, %116, %cst_64 {dimension_numbers = #tpu.dot_dimension_numbers<[1], [0], [0], [1], [0, 0, 1, 1], [], []>} : vector<8x128xf32>, vector<128x128xf32>, vector<8x128xf32> -> vector<8x128xf32>
    %c1_65 = arith.constant 1 : index
    %c0_66 = arith.constant 0 : index
    %c0_67 = arith.constant 0 : index
    %118 = vector.load %arg11[%c1_65, %c0_66, %c0_67] : memref<2x1x128xf32, #tpu.memory_space<vmem>>, vector<1x1x128xf32>
    %119 = vector.shape_cast %118 : vector<1x1x128xf32> to vector<1x128xf32>
    %120 = vector.broadcast %119 : vector<1x128xf32> to vector<8x128xf32>
    %121 = arith.addf %117, %120 : vector<8x128xf32>
    %122 = vector.extract_strided_slice %102 {offsets = [0, 256], sizes = [8, 128], strides = [1, 1]} : vector<8x384xf32> to vector<8x128xf32>
    %cst_68 = arith.constant 1.000000e+00 : f32
    %123 = vector.broadcast %cst_68 : f32 to vector<8x128xf32>
    %124 = arith.subf %108, %123 : vector<8x128xf32>
    %125 = arith.mulf %124, %121 : vector<8x128xf32>
    %126 = arith.addf %122, %125 : vector<8x128xf32>
    %127 = math.tanh %126 : vector<8x128xf32>
    %cst_69 = arith.constant 1.000000e+00 : f32
    %128 = vector.broadcast %cst_69 : f32 to vector<8x128xf32>
    %129 = arith.subf %128, %114 : vector<8x128xf32>
    %130 = arith.mulf %129, %127 : vector<8x128xf32>
    %131 = arith.mulf %114, %94 : vector<8x128xf32>
    %132 = arith.addf %130, %131 : vector<8x128xf32>
    %c1_70 = arith.constant 1 : index
    %c0_71 = arith.constant 0 : index
    %c0_72 = arith.constant 0 : index
    %133 = vector.load %arg15[%c1_70, %c0_71, %c0_72] : memref<2x8x128xf32, #tpu.memory_space<vmem>>, vector<1x8x128xf32>
    %134 = vector.shape_cast %133 : vector<1x8x128xf32> to vector<8x128xf32>
    %135 = vector.shape_cast %132 : vector<8x128xf32> to vector<1x8x128xf32>
    tpu.vector_store %arg15[%c1_70, %c0_71, %c0_72], %135 {strides = array<i32>} : memref<2x8x128xf32, #tpu.memory_space<vmem>>, vector<1x8x128xf32>,
    %c0_73 = arith.constant 0 : index
    %c0_74 = arith.constant 0 : index
    %136 = vector.load %arg12[%c0_73, %c0_74] : memref<1x128xf32, #tpu.memory_space<vmem>>, vector<1x128xf32>
    %137 = vector.broadcast %136 : vector<1x128xf32> to vector<8x128xf32>
    %138 = arith.mulf %132, %137 : vector<8x128xf32>
    %cst_75 = arith.constant dense<0.000000e+00> : vector<8xf32>
    %139 = vector.multi_reduction <add>, %138, %cst_75 [1] : vector<8x128xf32> to vector<8xf32>
    %140 = vector.shape_cast %139 : vector<8xf32> to vector<8x1xf32>
    %c0_76 = arith.constant 0 : index
    %c0_77 = arith.constant 0 : index
    %141 = vector.load %arg13[%c0_76, %c0_77] : memref<1x1xf32, #tpu.memory_space<vmem>>, vector<1x1xf32>
    %142 = vector.broadcast %141 : vector<1x1xf32> to vector<8x1xf32>
    %143 = arith.addf %140, %142 : vector<8x1xf32>
    %cst_78 = arith.constant 0.000000e+00 : f32
    %144 = vector.broadcast %cst_78 : f32 to vector<8x1xf32>
    %145 = arith.maximumf %143, %144 : vector<8x1xf32>
    %c0_79 = arith.constant 0 : index
    %c0_80 = arith.constant 0 : index
    %146 = vector.load %arg14[%c0_79, %c0_80] : memref<8x1xf32, #tpu.memory_space<vmem>>, vector<8x1xf32>
    tpu.vector_store %arg14[%c0_79, %c0_80], %145 {strides = array<i32>} : memref<8x1xf32, #tpu.memory_space<vmem>>, vector<8x1xf32>,
    return
  }
}

</mosaic_0001>

<llo_original>
// kernel: attn_decoder_gru_forward.1
$region0: #{attn_decoder_gru_forward.1}
  #allocation0 [shape = 'u32[]', space=smem, size = 0x4, offset = 0x4, fixed_abs, tag = 'smem constant byte address 0x4 - core index']
  #allocation1 [shape = 'u32[144,128]{1,0:T(1,128)}', space=vmem, size = 0x12000, scoped, tag = 'internal scratch']
  #allocation2 [shape = 'f32[1,1]{1,0:T(1,128)S(1)}', space=vmem, size = 0x200, scoped, tag = 'scoped memory for attn_decoder_gru_forward.1']
  %s0 = inlined_call_operand.vmem [shape: f32[8,4], index: 0, kind: input, shape index: {}]
  %s1 = inlined_call_operand.vmem [shape: f32[2,8,128], index: 1, kind: input, shape index: {}]
  %s2 = inlined_call_operand.hbm [shape: f32[128,128], index: 2, kind: input, shape index: {}]
  %s3 = inlined_call_operand.vmem [shape: f32[4,256], index: 3, kind: input, shape index: {}]
  %s4 = inlined_call_operand.hbm [shape: f32[1,128], index: 4, kind: input, shape index: {}]
  %s5 = inlined_call_operand.hbm [shape: f32[128,128], index: 5, kind: input, shape index: {}]
  %s6 = inlined_call_operand.hbm [shape: f32[128,128], index: 6, kind: input, shape index: {}]
  %s7 = inlined_call_operand.vmem [shape: f32[1,128], index: 7, kind: input, shape index: {}]
  %s8 = inlined_call_operand.hbm [shape: f32[2,256,384], index: 8, kind: input, shape index: {}]
  %s9 = inlined_call_operand.vmem [shape: f32[2,1,384], index: 9, kind: input, shape index: {}]
  %s10 = inlined_call_operand.hbm [shape: f32[2,128,128], index: 10, kind: input, shape index: {}]
  %s11 = inlined_call_operand.vmem [shape: f32[2,1,128], index: 11, kind: input, shape index: {}]
  %s12 = inlined_call_operand.vmem [shape: f32[1,128], index: 12, kind: input, shape index: {}]
  %s13 = inlined_call_operand.<no memory space> [shape: f32[1,1], index: 13, kind: input, shape index: {}]
  %s14 = inlined_call_operand.vmem [shape: f32[8,1], index: 14, kind: output, shape index: {0}]
  %s15 = inlined_call_operand.hbm [shape: f32[2,8,128], index: 15, kind: output, shape index: {1}]
  %s16 = inlined_call_operand.hbm [shape: f32[8,16], index: 16, kind: output, shape index: {2}]
  %17 = xla_tuple %s14, %s15, %s16
  %s18 = sld [smem:[#allocation0]]
  $region106: #{attn_decoder_gru_forward.1} parent=0
    _
  %s20 = ssub.s32 1, %s18
  %s21 = scalar_select 0, %s20, %s18
  %v22 = vstv %s13
  %23 = vst [vmem:[#allocation2] sm:$0x1] %v22
  $region1: #{attn_decoder_gru_forward.1} parent=0
    #allocation3 [shape = 'u8[65536]{0}', space=vmem, size = 0x10000, scoped, tag = 'input window, operand 2, single buffered']
    #allocation4 [shape = 's32[1]{0}', space=sflag, size = 0x4, scoped, tag = 'scoped memory for attn_decoder_gru_forward.1']
    #allocation5 [shape = 's32[1]{0}', space=sflag, size = 0x4, scoped, tag = 'scoped memory for attn_decoder_gru_forward.1']
    #allocation6 [shape = 'u8[512]{0}', space=vmem, size = 0x400, scoped, tag = 'input window, operand 4, single buffered']
    #allocation7 [shape = 's32[1]{0}', space=sflag, size = 0x4, scoped, tag = 'scoped memory for attn_decoder_gru_forward.1']
    #allocation8 [shape = 'u8[65536]{0}', space=vmem, size = 0x10000, scoped, tag = 'input window, operand 5, single buffered']
    #allocation9 [shape = 'u8[65536]{0}', space=vmem, size = 0x10000, scoped, tag = 'input window, operand 6, single buffered']
    #allocation10 [shape = 's32[1]{0}', space=sflag, size = 0x4, scoped, tag = 'scoped memory for attn_decoder_gru_forward.1']
    #allocation11 [shape = 'u8[786432]{0}', space=vmem, size = 0xc0000, scoped, tag = 'input window, operand 8, single buffered']
    #allocation12 [shape = 'u8[131072]{0}', space=vmem, size = 0x20000, scoped, tag = 'input window, operand 10, single buffered']
    #allocation13 [shape = 's32[1]{0}', space=sflag, size = 0x4, scoped, tag = 'scoped memory for attn_decoder_gru_forward.1']
    #allocation14 [shape = 'u8[8192]{0}', space=vmem, size = 0x2000, scoped, tag = 'output window, operand 1, single buffered']
    #allocation15 [shape = 'u8[4096]{0}', space=vmem, size = 0x1000, scoped, tag = 'output window, operand 2, single buffered']
    #allocation16 [shape = 's32[1]{0}', space=sflag, size = 0x4, scoped, tag = 'scoped memory for attn_decoder_gru_forward.1']
    %24 = vsyncpa [#allocation4], 0
    %25 = vsyncpa [#allocation7], 0
    %26 = vsyncpa [#allocation10], 0
    %27 = vsyncpa [#allocation13], 0
    %28 = vsyncpa [#allocation5], 0
    %29 = vsyncpa [#allocation16], 0
    // Predicated region
    $region2: #{attn_decoder_gru_forward.1} parent=1 // pred_check
      _
    $region3: #{attn_decoder_gru_forward.1} parent=1 // pred_check_branch
      %31 = sbr.rel (0) target = $region5
    $region4: #{attn_decoder_gru_forward.1} parent=1 // pred_region
      _
    $region5: #{attn_decoder_gru_forward.1} parent=1 // pred_fallthru
      _
    // Predicated region
    $region6: #{attn_decoder_gru_forward.1} parent=1 // pred_check
      _
    $region7: #{attn_decoder_gru_forward.1} parent=1 // pred_check_branch
      %33 = sbr.rel (0) target = $region9
    $region8: #{attn_decoder_gru_forward.1} parent=1 // pred_region
      _
    $region9: #{attn_decoder_gru_forward.1} parent=1 // pred_fallthru
      _
    // Predicated region
    $region10: #{attn_decoder_gru_forward.1} parent=1 // pred_check
      _
    $region11: #{attn_decoder_gru_forward.1} parent=1 // pred_check_branch
      %35 = sbr.rel (0) target = $region13
    $region12: #{attn_decoder_gru_forward.1} parent=1 // pred_region
      %s37 = ssub.s32 2048, 2048
      %38 = vsyncadd [#allocation4], %s37
      %s39 = sshll.u32 [#allocation3], 4
      %s40 = int_to_ptr.vmem [resolvable:$true] %s39
      %45 = dma.hbm_to_vmem [thread:$0]  %s2, 2048, %s40, [#allocation4], 128, 128, 8
    $region13: #{attn_decoder_gru_forward.1} parent=1 // pred_fallthru
      _
    // Predicated region
    $region14: #{attn_decoder_gru_forward.1} parent=1 // pred_check
      _
    $region15: #{attn_decoder_gru_forward.1} parent=1 // pred_check_branch
      %47 = sbr.rel (0) target = $region17
    $region16: #{attn_decoder_gru_forward.1} parent=1 // pred_region
      _
    $region17: #{attn_decoder_gru_forward.1} parent=1 // pred_fallthru
      _
    // Predicated region
    $region18: #{attn_decoder_gru_forward.1} parent=1 // pred_check
      _
    $region19: #{attn_decoder_gru_forward.1} parent=1 // pred_check_branch
      %49 = sbr.rel (0) target = $region21
    $region20: #{attn_decoder_gru_forward.1} parent=1 // pred_region
      %s51 = ssub.s32 16, 16
      %52 = vsyncadd [#allocation7], %s51
      %s54 = sshll.u32 [#allocation6], 4
      %s55 = int_to_ptr.vmem [resolvable:$true] %s54
      %57 = dma.hbm_to_vmem [thread:$0]  %s4, 16, %s55, [#allocation7]
    $region21: #{attn_decoder_gru_forward.1} parent=1 // pred_fallthru
      _
    // Predicated region
    $region22: #{attn_decoder_gru_forward.1} parent=1 // pred_check
      _
    $region23: #{attn_decoder_gru_forward.1} parent=1 // pred_check_branch
      %59 = sbr.rel (0) target = $region25
    $region24: #{attn_decoder_gru_forward.1} parent=1 // pred_region
      %s61 = ssub.s32 2048, 2048
      %62 = vsyncadd [#allocation7], %s61
      %s63 = sshll.u32 [#allocation8], 4
      %s64 = int_to_ptr.vmem [resolvable:$true] %s63
      %69 = dma.hbm_to_vmem [thread:$0]  %s5, 2048, %s64, [#allocation7], 128, 128, 8
    $region25: #{attn_decoder_gru_forward.1} parent=1 // pred_fallthru
      _
    // Predicated region
    $region26: #{attn_decoder_gru_forward.1} parent=1 // pred_check
      _
    $region27: #{attn_decoder_gru_forward.1} parent=1 // pred_check_branch
      %71 = sbr.rel (0) target = $region29
    $region28: #{attn_decoder_gru_forward.1} parent=1 // pred_region
      %s73 = ssub.s32 2048, 2048
      %74 = vsyncadd [#allocation10], %s73
      %s75 = sshll.u32 [#allocation9], 4
      %s76 = int_to_ptr.vmem [resolvable:$true] %s75
      %81 = dma.hbm_to_vmem [thread:$0]  %s6, 2048, %s76, [#allocation10], 128, 128, 8
    $region29: #{attn_decoder_gru_forward.1} parent=1 // pred_fallthru
      _
    // Predicated region
    $region30: #{attn_decoder_gru_forward.1} parent=1 // pred_check
      _
    $region31: #{attn_decoder_gru_forward.1} parent=1 // pred_check_branch
      %83 = sbr.rel (0) target = $region33
    $region32: #{attn_decoder_gru_forward.1} parent=1 // pred_region
      _
    $region33: #{attn_decoder_gru_forward.1} parent=1 // pred_fallthru
      _
    // Predicated region
    $region34: #{attn_decoder_gru_forward.1} parent=1 // pred_check
      _
    $region35: #{attn_decoder_gru_forward.1} parent=1 // pred_check_branch
      %85 = sbr.rel (0) target = $region37
    $region36: #{attn_decoder_gru_forward.1} parent=1 // pred_region
      %s87 = ssub.s32 24576, 24576
      %88 = vsyncadd [#allocation10], %s87
      %s89 = sshll.u32 [#allocation11], 4
      %s90 = int_to_ptr.vmem [resolvable:$true] %s89
      %95 = dma.hbm_to_vmem [thread:$0]  %s8, 24576, %s90, [#allocation10], 384, 384, 24
    $region37: #{attn_decoder_gru_forward.1} parent=1 // pred_fallthru
      _
    // Predicated region
    $region38: #{attn_decoder_gru_forward.1} parent=1 // pred_check
      _
    $region39: #{attn_decoder_gru_forward.1} parent=1 // pred_check_branch
      %97 = sbr.rel (0) target = $region41
    $region40: #{attn_decoder_gru_forward.1} parent=1 // pred_region
      _
    $region41: #{attn_decoder_gru_forward.1} parent=1 // pred_fallthru
      _
    // Predicated region
    $region42: #{attn_decoder_gru_forward.1} parent=1 // pred_check
      _
    $region43: #{attn_decoder_gru_forward.1} parent=1 // pred_check_branch
      %99 = sbr.rel (0) target = $region45
    $region44: #{attn_decoder_gru_forward.1} parent=1 // pred_region
      %s101 = ssub.s32 4096, 4096
      %102 = vsyncadd [#allocation13], %s101
      %s103 = sshll.u32 [#allocation12], 4
      %s104 = int_to_ptr.vmem [resolvable:$true] %s103
      %109 = dma.hbm_to_vmem [thread:$0]  %s10, 4096, %s104, [#allocation13], 128, 128, 8
    $region45: #{attn_decoder_gru_forward.1} parent=1 // pred_fallthru
      _
    // Predicated region
    $region46: #{attn_decoder_gru_forward.1} parent=1 // pred_check
      _
    $region47: #{attn_decoder_gru_forward.1} parent=1 // pred_check_branch
      %111 = sbr.rel (0) target = $region49
    $region48: #{attn_decoder_gru_forward.1} parent=1 // pred_region
      _
    $region49: #{attn_decoder_gru_forward.1} parent=1 // pred_fallthru
      _
    // Predicated region
    $region50: #{attn_decoder_gru_forward.1} parent=1 // pred_check
      _
    $region51: #{attn_decoder_gru_forward.1} parent=1 // pred_check_branch
      %113 = sbr.rel (0) target = $region53
    $region52: #{attn_decoder_gru_forward.1} parent=1 // pred_region
      _
    $region53: #{attn_decoder_gru_forward.1} parent=1 // pred_fallthru
      _
    // Predicated region
    $region54: #{attn_decoder_gru_forward.1} parent=1 // pred_check
      _
    $region55: #{attn_decoder_gru_forward.1} parent=1 // pred_check_branch
      %115 = sbr.rel (0) target = $region57
    $region56: #{attn_decoder_gru_forward.1} parent=1 // pred_region
      _
    $region57: #{attn_decoder_gru_forward.1} parent=1 // pred_fallthru
      _
    // Predicated region
    $region58: #{attn_decoder_gru_forward.1} parent=1 // pred_check
      _
    $region59: #{attn_decoder_gru_forward.1} parent=1 // pred_check_branch
      %117 = sbr.rel (0) target = $region61
    $region60: #{attn_decoder_gru_forward.1} parent=1 // pred_region
      %118 = dma.done [#allocation4], 2048
    $region61: #{attn_decoder_gru_forward.1} parent=1 // pred_fallthru
      _
    // Predicated region
    $region62: #{attn_decoder_gru_forward.1} parent=1 // pred_check
      _
    $region63: #{attn_decoder_gru_forward.1} parent=1 // pred_check_branch
      %120 = sbr.rel (0) target = $region65
    $region64: #{attn_decoder_gru_forward.1} parent=1 // pred_region
      %121 = dma.done [#allocation7], 16
    $region65: #{attn_decoder_gru_forward.1} parent=1 // pred_fallthru
      _
    // Predicated region
    $region66: #{attn_decoder_gru_forward.1} parent=1 // pred_check
      _
    $region67: #{attn_decoder_gru_forward.1} parent=1 // pred_check_branch
      %123 = sbr.rel (0) target = $region69
    $region68: #{attn_decoder_gru_forward.1} parent=1 // pred_region
      %124 = dma.done [#allocation7], 2048
    $region69: #{attn_decoder_gru_forward.1} parent=1 // pred_fallthru
      _
    // Predicated region
    $region70: #{attn_decoder_gru_forward.1} parent=1 // pred_check
      _
    $region71: #{attn_decoder_gru_forward.1} parent=1 // pred_check_branch
      %126 = sbr.rel (0) target = $region73
    $region72: #{attn_decoder_gru_forward.1} parent=1 // pred_region
      %127 = dma.done [#allocation10], 2048
    $region73: #{attn_decoder_gru_forward.1} parent=1 // pred_fallthru
      _
    // Predicated region
    $region74: #{attn_decoder_gru_forward.1} parent=1 // pred_check
      _
    $region75: #{attn_decoder_gru_forward.1} parent=1 // pred_check_branch
      %129 = sbr.rel (0) target = $region77
    $region76: #{attn_decoder_gru_forward.1} parent=1 // pred_region
      %130 = dma.done [#allocation10], 24576
    $region77: #{attn_decoder_gru_forward.1} parent=1 // pred_fallthru
      _
    // Predicated region
    $region78: #{attn_decoder_gru_forward.1} parent=1 // pred_check
      _
    $region79: #{attn_decoder_gru_forward.1} parent=1 // pred_check_branch
      %132 = sbr.rel (0) target = $region81
    $region80: #{attn_decoder_gru_forward.1} parent=1 // pred_region
      %133 = dma.done [#allocation13], 4096
    $region81: #{attn_decoder_gru_forward.1} parent=1 // pred_fallthru
      _
    %v134 = vld [vmem:[%s0] sm:$0xff]
    %v135 = vld [vmem:[%s1] sm:$0xff]
    %v136 = vld [vmem:[%s3] sm:$0xff]
    %v138 = vcombine.high %v136, %v136
    %vm139 = vcmask 31744
    %v141 = vsel %vm139, %v134, 0
    %vm143 = vcmask 1043456
    %v144 = vsel %vm143, %v136, 0
    %v146 = vsel %vm143, %v138, 0
    %148 = vmatprep.subr.mxu0 %v146
    %149 = vmatpush1.msra.mxu0 %v144
    %150 = vmatprep.subr.mxu0 0.0
    %151 = vmatpush1.msra.mxu0 0.0
    %152 = vmatprep.subr.mxu0 0.0
    %153 = vmatpush1.msra.mxu0 0.0
    %154 = vmatprep.subr.mxu0 0.0
    %155 = vmatpush1.msra.mxu0 0.0
    %156 = vmatprep.subr.mxu0 0.0
    %157 = vmatpush1.msra.mxu0 0.0
    %158 = vmatprep.subr.mxu0 0.0
    %159 = vmatpush1.msra.mxu0 0.0
    %160 = vmatprep.subr.mxu0 0.0
    %161 = vmatpush1.msra.mxu0 0.0
    %162 = vmatprep.subr.mxu0 0.0
    %163 = vmatpush1.msra.mxu0 0.0
    %164 = vmatprep.subr.mxu0 0.0
    %165 = vmatpush1.msra.mxu0 0.0
    %166 = vmatprep.subr.mxu0 0.0
    %167 = vmatpush1.msra.mxu0 0.0
    %168 = vmatprep.subr.mxu0 0.0
    %169 = vmatpush1.msra.mxu0 0.0
    %170 = vmatprep.subr.mxu0 0.0
    %171 = vmatpush1.msra.mxu0 0.0
    %172 = vmatprep.subr.mxu0 0.0
    %173 = vmatpush1.msra.mxu0 0.0
    %174 = vmatprep.subr.mxu0 0.0
    %175 = vmatpush1.msra.mxu0 0.0
    %176 = vmatprep.subr.mxu0 0.0
    %177 = vmatpush1.msra.mxu0 0.0
    %178 = vmatprep.subr.mxu0 0.0
    %179 = vmatpush1.msra.mxu0 0.0
    %180 = vmatprep.subr.mxu0 0.0
    %181 = vmatpush1.msra.mxu0 0.0
    %182 = vmatprep.subr.mxu0 0.0
    %183 = vmatpush1.msra.mxu0 0.0
    %184 = vmatprep.subr.mxu0 0.0
    %185 = vmatpush1.msra.mxu0 0.0
    %186 = vmatprep.subr.mxu0 0.0
    %187 = vmatpush1.msra.mxu0 0.0
    %188 = vmatprep.subr.mxu0 0.0
    %189 = vmatpush1.msra.mxu0 0.0
    %190 = vmatprep.subr.mxu0 0.0
    %191 = vmatpush1.msra.mxu0 0.0
    %192 = vmatprep.subr.mxu0 0.0
    %193 = vmatpush1.msra.mxu0 0.0
    %194 = vmatprep.subr.mxu0 0.0
    %195 = vmatpush1.msra.mxu0 0.0
    %196 = vmatprep.subr.mxu0 0.0
    %197 = vmatpush1.msra.mxu0 0.0
    %198 = vmatprep.subr.mxu0 0.0
    %199 = vmatpush1.msra.mxu0 0.0
    %200 = vmatprep.subr.mxu0 0.0
    %201 = vmatpush1.msra.mxu0 0.0
    %202 = vmatprep.subr.mxu0 0.0
    %203 = vmatpush1.msra.mxu0 0.0
    %204 = vmatprep.subr.mxu0 0.0
    %205 = vmatpush1.msra.mxu0 0.0
    %206 = vmatprep.subr.mxu0 0.0
    %207 = vmatpush1.msra.mxu0 0.0
    %208 = vmatprep.subr.mxu0 0.0
    %209 = vmatpush1.msra.mxu0 0.0
    %210 = vmatprep.subr.mxu0 0.0
    %211 = vmatpush1.msra.mxu0 0.0
    %212 = vmatprep.mubr.f32.mxu0 0.0
    %213 = vmatmul.mubr.f32.gmra.mrb[0].mxu0 %v141
    %v214 = vpop.f32.mrb[0].mxu0
    %v215 = vadd.f32 0.0, %v214
    %v216 = vpop.f32.mrb[0].mxu0
    %v217 = vadd.f32 0.0, %v216
    %218 = vdwg.mxu0
    %v219 = vld [vmem:[#allocation8] sm:$0xff]
    %v220 = vld [vmem:[#allocation8 + $0x8] sm:$0xff]
    %v221 = vld [vmem:[#allocation8 + $0x10] sm:$0xff]
    %v222 = vld [vmem:[#allocation8 + $0x18] sm:$0xff]
    %v223 = vld [vmem:[#allocation8 + $0x20] sm:$0xff]
    %v224 = vld [vmem:[#allocation8 + $0x28] sm:$0xff]
    %v225 = vld [vmem:[#allocation8 + $0x30] sm:$0xff]
    %v226 = vld [vmem:[#allocation8 + $0x38] sm:$0xff]
    %v227 = vld [vmem:[#allocation8 + $0x40] sm:$0xff]
    %v228 = vld [vmem:[#allocation8 + $0x48] sm:$0xff]
    %v229 = vld [vmem:[#allocation8 + $0x50] sm:$0xff]
    %v230 = vld [vmem:[#allocation8 + $0x58] sm:$0xff]
    %v231 = vld [vmem:[#allocation8 + $0x60] sm:$0xff]
    %v232 = vld [vmem:[#allocation8 + $0x68] sm:$0xff]
    %v233 = vld [vmem:[#allocation8 + $0x70] sm:$0xff]
    %v234 = vld [vmem:[#allocation8 + $0x78] sm:$0xff]
    %235 = vmatprep.subr.mxu0 0.0
    %236 = vmatpush1.msra.mxu0 %v219
    %237 = vmatprep.subr.mxu0 0.0
    %238 = vmatpush1.msra.mxu0 %v220
    %239 = vmatprep.subr.mxu0 0.0
    %240 = vmatpush1.msra.mxu0 %v221
    %241 = vmatprep.subr.mxu0 0.0
    %242 = vmatpush1.msra.mxu0 %v222
    %243 = vmatprep.subr.mxu0 0.0
    %244 = vmatpush1.msra.mxu0 %v223
    %245 = vmatprep.subr.mxu0 0.0
    %246 = vmatpush1.msra.mxu0 %v224
    %247 = vmatprep.subr.mxu0 0.0
    %248 = vmatpush1.msra.mxu0 %v225
    %249 = vmatprep.subr.mxu0 0.0
    %250 = vmatpush1.msra.mxu0 %v226
    %251 = vmatprep.subr.mxu0 0.0
    %252 = vmatpush1.msra.mxu0 %v227
    %253 = vmatprep.subr.mxu0 0.0
    %254 = vmatpush1.msra.mxu0 %v228
    %255 = vmatprep.subr.mxu0 0.0
    %256 = vmatpush1.msra.mxu0 %v229
    %257 = vmatprep.subr.mxu0 0.0
    %258 = vmatpush1.msra.mxu0 %v230
    %259 = vmatprep.subr.mxu0 0.0
    %260 = vmatpush1.msra.mxu0 %v231
    %261 = vmatprep.subr.mxu0 0.0
    %262 = vmatpush1.msra.mxu0 %v232
    %263 = vmatprep.subr.mxu0 0.0
    %264 = vmatpush1.msra.mxu0 %v233
    %265 = vmatprep.subr.mxu0 0.0
    %266 = vmatpush1.msra.mxu0 %v234
    %267 = vmatprep.subr.mxu0 0.0
    %268 = vmatpush1.msra.mxu0 0.0
    %269 = vmatprep.subr.mxu0 0.0
    %270 = vmatpush1.msra.mxu0 0.0
    %271 = vmatprep.subr.mxu0 0.0
    %272 = vmatpush1.msra.mxu0 0.0
    %273 = vmatprep.subr.mxu0 0.0
    %274 = vmatpush1.msra.mxu0 0.0
    %275 = vmatprep.subr.mxu0 0.0
    %276 = vmatpush1.msra.mxu0 0.0
    %277 = vmatprep.subr.mxu0 0.0
    %278 = vmatpush1.msra.mxu0 0.0
    %279 = vmatprep.subr.mxu0 0.0
    %280 = vmatpush1.msra.mxu0 0.0
    %281 = vmatprep.subr.mxu0 0.0
    %282 = vmatpush1.msra.mxu0 0.0
    %283 = vmatprep.subr.mxu0 0.0
    %284 = vmatpush1.msra.mxu0 0.0
    %285 = vmatprep.subr.mxu0 0.0
    %286 = vmatpush1.msra.mxu0 0.0
    %287 = vmatprep.subr.mxu0 0.0
    %288 = vmatpush1.msra.mxu0 0.0
    %289 = vmatprep.subr.mxu0 0.0
    %290 = vmatpush1.msra.mxu0 0.0
    %291 = vmatprep.subr.mxu0 0.0
    %292 = vmatpush1.msra.mxu0 0.0
    %293 = vmatprep.subr.mxu0 0.0
    %294 = vmatpush1.msra.mxu0 0.0
    %295 = vmatprep.subr.mxu0 0.0
    %296 = vmatpush1.msra.mxu0 0.0
    %297 = vmatprep.subr.mxu0 0.0
    %298 = vmatpush1.msra.mxu0 0.0
    %299 = vmatprep.mubr.f32.mxu0 0.0
    %300 = vmatmul.mubr.f32.gmra.mrb[0].mxu0 %v135
    %v301 = vpop.f32.mrb[0].mxu0
    %v302 = vadd.f32 0.0, %v301
    %v303 = vpop.f32.mrb[0].mxu0
    %304 = vdwg.mxu0
    %v305 = vadd.f32 %v215, %v302
    %v306 = vld [vmem:[#allocation6] sm:$0x1]
    %v308 = vlaneseq
    %v309 = vshrl.u32 %v308, 7
    %v310 = vsub.s32 0, %v309
    %v311 = vrot.slane %v306, %v310
    %v313 = vadd.f32 %v305, %v311
    %vm314 = vcmask 130048
    %v315 = vsel %vm314, %v313, -inf
    %316 = vmax.xlane.f32.xlu0 %v315
    %v317 = vpop.xlane.xlu0 %316
    %v318 = vsub.f32 %v313, %v317
    %v319 = vmul.f32 %v318, 1.442695
    %v320 = vpow.pop %v319
    %v321 = vsel %vm314, %v320, 0.0
    %322 = vadd.xlane.f32.xlu0 %v321
    %v323 = vpop.xlane.xlu0 %322
    %v324 = vrcp.pop %v323
    %v325 = vmul.f32 %v320, %v324
    %326 = vst.msk [vmem:[#allocation15] sm:$0xff] %vm314, %v325
    %v327 = vlaneseq
    %v328 = vand.u32 %v327, 127
    %v329 = vlaneseq
    %v330 = vshrl.u32 %v329, 7
    %v331 = vmul.u32 %v330, 16
    %vm332 = vcmp.ge.s32.totalorder %v328, %v331
    %v333 = vadd.s32 %v331, 16
    %vm334 = vcmp.lt.s32.totalorder %v328, %v333
    %vm335 = vmand %vm332, %vm334
    %v336 = vsel %vm335, %v320, 0.0
    %v337 = vmul.f32 %v336, %v324
    %v338 = vld [vmem:[#allocation3] sm:$0xff]
    %v339 = vld [vmem:[#allocation3 + $0x8] sm:$0xff]
    %v340 = vld [vmem:[#allocation3 + $0x10] sm:$0xff]
    %v341 = vld [vmem:[#allocation3 + $0x18] sm:$0xff]
    %v342 = vld [vmem:[#allocation3 + $0x20] sm:$0xff]
    %v343 = vld [vmem:[#allocation3 + $0x28] sm:$0xff]
    %v344 = vld [vmem:[#allocation3 + $0x30] sm:$0xff]
    %v345 = vld [vmem:[#allocation3 + $0x38] sm:$0xff]
    %v346 = vld [vmem:[#allocation3 + $0x40] sm:$0xff]
    %v347 = vld [vmem:[#allocation3 + $0x48] sm:$0xff]
    %v348 = vld [vmem:[#allocation3 + $0x50] sm:$0xff]
    %v349 = vld [vmem:[#allocation3 + $0x58] sm:$0xff]
    %v350 = vld [vmem:[#allocation3 + $0x60] sm:$0xff]
    %v351 = vld [vmem:[#allocation3 + $0x68] sm:$0xff]
    %v352 = vld [vmem:[#allocation3 + $0x70] sm:$0xff]
    %v353 = vld [vmem:[#allocation3 + $0x78] sm:$0xff]
    %354 = vmatprep.subr.mxu0 0.0
    %355 = vmatpush1.msra.mxu0 %v338
    %356 = vmatprep.subr.mxu0 0.0
    %357 = vmatpush1.msra.mxu0 %v339
    %358 = vmatprep.subr.mxu0 0.0
    %359 = vmatpush1.msra.mxu0 %v340
    %360 = vmatprep.subr.mxu0 0.0
    %361 = vmatpush1.msra.mxu0 %v341
    %362 = vmatprep.subr.mxu0 0.0
    %363 = vmatpush1.msra.mxu0 %v342
    %364 = vmatprep.subr.mxu0 0.0
    %365 = vmatpush1.msra.mxu0 %v343
    %366 = vmatprep.subr.mxu0 0.0
    %367 = vmatpush1.msra.mxu0 %v344
    %368 = vmatprep.subr.mxu0 0.0
    %369 = vmatpush1.msra.mxu0 %v345
    %370 = vmatprep.subr.mxu0 0.0
    %371 = vmatpush1.msra.mxu0 %v346
    %372 = vmatprep.subr.mxu0 0.0
    %373 = vmatpush1.msra.mxu0 %v347
    %374 = vmatprep.subr.mxu0 0.0
    %375 = vmatpush1.msra.mxu0 %v348
    %376 = vmatprep.subr.mxu0 0.0
    %377 = vmatpush1.msra.mxu0 %v349
    %378 = vmatprep.subr.mxu0 0.0
    %379 = vmatpush1.msra.mxu0 %v350
    %380 = vmatprep.subr.mxu0 0.0
    %381 = vmatpush1.msra.mxu0 %v351
    %382 = vmatprep.subr.mxu0 0.0
    %383 = vmatpush1.msra.mxu0 %v352
    %384 = vmatprep.subr.mxu0 0.0
    %385 = vmatpush1.msra.mxu0 %v353
    %386 = vmatprep.subr.mxu0 0.0
    %387 = vmatpush1.msra.mxu0 0.0
    %388 = vmatprep.subr.mxu0 0.0
    %389 = vmatpush1.msra.mxu0 0.0
    %390 = vmatprep.subr.mxu0 0.0
    %391 = vmatpush1.msra.mxu0 0.0
    %392 = vmatprep.subr.mxu0 0.0
    %393 = vmatpush1.msra.mxu0 0.0
    %394 = vmatprep.subr.mxu0 0.0
    %395 = vmatpush1.msra.mxu0 0.0
    %396 = vmatprep.subr.mxu0 0.0
    %397 = vmatpush1.msra.mxu0 0.0
    %398 = vmatprep.subr.mxu0 0.0
    %399 = vmatpush1.msra.mxu0 0.0
    %400 = vmatprep.subr.mxu0 0.0
    %401 = vmatpush1.msra.mxu0 0.0
    %402 = vmatprep.subr.mxu0 0.0
    %403 = vmatpush1.msra.mxu0 0.0
    %404 = vmatprep.subr.mxu0 0.0
    %405 = vmatpush1.msra.mxu0 0.0
    %406 = vmatprep.subr.mxu0 0.0
    %407 = vmatpush1.msra.mxu0 0.0
    %408 = vmatprep.subr.mxu0 0.0
    %409 = vmatpush1.msra.mxu0 0.0
    %410 = vmatprep.subr.mxu0 0.0
    %411 = vmatpush1.msra.mxu0 0.0
    %412 = vmatprep.subr.mxu0 0.0
    %413 = vmatpush1.msra.mxu0 0.0
    %414 = vmatprep.subr.mxu0 0.0
    %415 = vmatpush1.msra.mxu0 0.0
    %416 = vmatprep.subr.mxu0 0.0
    %417 = vmatpush1.msra.mxu0 0.0
    %418 = vmatprep.mubr.f32.mxu0 0.0
    %419 = vmatmul.mubr.f32.gmra.mrb[0].mxu0 %v337
    %v420 = vpop.f32.mrb[0].mxu0
    %v421 = vadd.f32 0.0, %v420
    %v422 = vpop.f32.mrb[0].mxu0
    %423 = vdwg.mxu0
    %v424 = vld [vmem:[#allocation9] sm:$0xff]
    %v425 = vld [vmem:[#allocation9 + $0x8] sm:$0xff]
    %v426 = vld [vmem:[#allocation9 + $0x10] sm:$0xff]
    %v427 = vld [vmem:[#allocation9 + $0x18] sm:$0xff]
    %v428 = vld [vmem:[#allocation9 + $0x20] sm:$0xff]
    %v429 = vld [vmem:[#allocation9 + $0x28] sm:$0xff]
    %v430 = vld [vmem:[#allocation9 + $0x30] sm:$0xff]
    %v431 = vld [vmem:[#allocation9 + $0x38] sm:$0xff]
    %v432 = vld [vmem:[#allocation9 + $0x40] sm:$0xff]
    %v433 = vld [vmem:[#allocation9 + $0x48] sm:$0xff]
    %v434 = vld [vmem:[#allocation9 + $0x50] sm:$0xff]
    %v435 = vld [vmem:[#allocation9 + $0x58] sm:$0xff]
    %v436 = vld [vmem:[#allocation9 + $0x60] sm:$0xff]
    %v437 = vld [vmem:[#allocation9 + $0x68] sm:$0xff]
    %v438 = vld [vmem:[#allocation9 + $0x70] sm:$0xff]
    %v439 = vld [vmem:[#allocation9 + $0x78] sm:$0xff]
    %440 = vmatprep.subr.mxu0 0.0
    %441 = vmatpush1.msra.mxu0 %v424
    %442 = vmatprep.subr.mxu0 0.0
    %443 = vmatpush1.msra.mxu0 %v425
    %444 = vmatprep.subr.mxu0 0.0
    %445 = vmatpush1.msra.mxu0 %v426
    %446 = vmatprep.subr.mxu0 0.0
    %447 = vmatpush1.msra.mxu0 %v427
    %448 = vmatprep.subr.mxu0 0.0
    %449 = vmatpush1.msra.mxu0 %v428
    %450 = vmatprep.subr.mxu0 0.0
    %451 = vmatpush1.msra.mxu0 %v429
    %452 = vmatprep.subr.mxu0 0.0
    %453 = vmatpush1.msra.mxu0 %v430
    %454 = vmatprep.subr.mxu0 0.0
    %455 = vmatpush1.msra.mxu0 %v431
    %456 = vmatprep.subr.mxu0 0.0
    %457 = vmatpush1.msra.mxu0 %v432
    %458 = vmatprep.subr.mxu0 0.0
    %459 = vmatpush1.msra.mxu0 %v433
    %460 = vmatprep.subr.mxu0 0.0
    %461 = vmatpush1.msra.mxu0 %v434
    %462 = vmatprep.subr.mxu0 0.0
    %463 = vmatpush1.msra.mxu0 %v435
    %464 = vmatprep.subr.mxu0 0.0
    %465 = vmatpush1.msra.mxu0 %v436
    %466 = vmatprep.subr.mxu0 0.0
    %467 = vmatpush1.msra.mxu0 %v437
    %468 = vmatprep.subr.mxu0 0.0
    %469 = vmatpush1.msra.mxu0 %v438
    %470 = vmatprep.subr.mxu0 0.0
    %471 = vmatpush1.msra.mxu0 %v439
    %472 = vmatprep.subr.mxu0 0.0
    %473 = vmatpush1.msra.mxu0 0.0
    %474 = vmatprep.subr.mxu0 0.0
    %475 = vmatpush1.msra.mxu0 0.0
    %476 = vmatprep.subr.mxu0 0.0
    %477 = vmatpush1.msra.mxu0 0.0
    %478 = vmatprep.subr.mxu0 0.0
    %479 = vmatpush1.msra.mxu0 0.0
    %480 = vmatprep.subr.mxu0 0.0
    %481 = vmatpush1.msra.mxu0 0.0
    %482 = vmatprep.subr.mxu0 0.0
    %483 = vmatpush1.msra.mxu0 0.0
    %484 = vmatprep.subr.mxu0 0.0
    %485 = vmatpush1.msra.mxu0 0.0
    %486 = vmatprep.subr.mxu0 0.0
    %487 = vmatpush1.msra.mxu0 0.0
    %488 = vmatprep.subr.mxu0 0.0
    %489 = vmatpush1.msra.mxu0 0.0
    %490 = vmatprep.subr.mxu0 0.0
    %491 = vmatpush1.msra.mxu0 0.0
    %492 = vmatprep.subr.mxu0 0.0
    %493 = vmatpush1.msra.mxu0 0.0
    %494 = vmatprep.subr.mxu0 0.0
    %495 = vmatpush1.msra.mxu0 0.0
    %496 = vmatprep.subr.mxu0 0.0
    %497 = vmatpush1.msra.mxu0 0.0
    %498 = vmatprep.subr.mxu0 0.0
    %499 = vmatpush1.msra.mxu0 0.0
    %500 = vmatprep.subr.mxu0 0.0
    %501 = vmatpush1.msra.mxu0 0.0
    %502 = vmatprep.subr.mxu0 0.0
    %503 = vmatpush1.msra.mxu0 0.0
    %504 = vmatprep.mubr.f32.mxu0 0.0
    %505 = vmatmul.mubr.f32.gmra.mrb[0].mxu0 %v421
    %v506 = vpop.f32.mrb[0].mxu0
    %v507 = vadd.f32 0.0, %v506
    %v508 = vpop.f32.mrb[0].mxu0
    %509 = vdwg.mxu0
    %v510 = vadd.f32 %v217, %v507
    %v511 = vld [vmem:[%s7] sm:$0x1]
    %v513 = vlaneseq
    %v514 = vshrl.u32 %v513, 7
    %v515 = vsub.s32 0, %v514
    %v516 = vrot.slane %v511, %v515
    %v518 = vadd.f32 %v510, %v516
    %v519 = vmax.f32 %v518, 0.0
    %v520 = vld [vmem:[%s1] sm:$0xff]
    %v521 = vld [vmem:[#allocation11] sm:$0xff]
    %v522 = vld [vmem:[#allocation11 + $0x8] sm:$0xff]
    %v523 = vld [vmem:[#allocation11 + $0x10] sm:$0xff]
    %v524 = vld [vmem:[#allocation11 + $0x18] sm:$0xff]
    %v525 = vld [vmem:[#allocation11 + $0x20] sm:$0xff]
    %v526 = vld [vmem:[#allocation11 + $0x28] sm:$0xff]
    %v527 = vld [vmem:[#allocation11 + $0x30] sm:$0xff]
    %v528 = vld [vmem:[#allocation11 + $0x38] sm:$0xff]
    %v529 = vld [vmem:[#allocation11 + $0x40] sm:$0xff]
    %v530 = vld [vmem:[#allocation11 + $0x48] sm:$0xff]
    %v531 = vld [vmem:[#allocation11 + $0x50] sm:$0xff]
    %v532 = vld [vmem:[#allocation11 + $0x58] sm:$0xff]
    %v533 = vld [vmem:[#allocation11 + $0x60] sm:$0xff]
    %v534 = vld [vmem:[#allocation11 + $0x68] sm:$0xff]
    %v535 = vld [vmem:[#allocation11 + $0x70] sm:$0xff]
    %v536 = vld [vmem:[#allocation11 + $0x78] sm:$0xff]
    %v537 = vld [vmem:[#allocation11 + $0x80] sm:$0xff]
    %v538 = vld [vmem:[#allocation11 + $0x88] sm:$0xff]
    %v539 = vld [vmem:[#allocation11 + $0x90] sm:$0xff]
    %v540 = vld [vmem:[#allocation11 + $0x98] sm:$0xff]
    %v541 = vld [vmem:[#allocation11 + $0xa0] sm:$0xff]
    %v542 = vld [vmem:[#allocation11 + $0xa8] sm:$0xff]
    %v543 = vld [vmem:[#allocation11 + $0xb0] sm:$0xff]
    %v544 = vld [vmem:[#allocation11 + $0xb8] sm:$0xff]
    %v545 = vld [vmem:[#allocation11 + $0xc0] sm:$0xff]
    %v546 = vld [vmem:[#allocation11 + $0xc8] sm:$0xff]
    %v547 = vld [vmem:[#allocation11 + $0xd0] sm:$0xff]
    %v548 = vld [vmem:[#allocation11 + $0xd8] sm:$0xff]
    %v549 = vld [vmem:[#allocation11 + $0xe0] sm:$0xff]
    %v550 = vld [vmem:[#allocation11 + $0xe8] sm:$0xff]
    %v551 = vld [vmem:[#allocation11 + $0xf0] sm:$0xff]
    %v552 = vld [vmem:[#allocation11 + $0xf8] sm:$0xff]
    %v553 = vld [vmem:[#allocation11 + $0x100] sm:$0xff]
    %v554 = vld [vmem:[#allocation11 + $0x108] sm:$0xff]
    %v555 = vld [vmem:[#allocation11 + $0x110] sm:$0xff]
    %v556 = vld [vmem:[#allocation11 + $0x118] sm:$0xff]
    %v557 = vld [vmem:[#allocation11 + $0x120] sm:$0xff]
    %v558 = vld [vmem:[#allocation11 + $0x128] sm:$0xff]
    %v559 = vld [vmem:[#allocation11 + $0x130] sm:$0xff]
    %v560 = vld [vmem:[#allocation11 + $0x138] sm:$0xff]
    %v561 = vld [vmem:[#allocation11 + $0x140] sm:$0xff]
    %v562 = vld [vmem:[#allocation11 + $0x148] sm:$0xff]
    %v563 = vld [vmem:[#allocation11 + $0x150] sm:$0xff]
    %v564 = vld [vmem:[#allocation11 + $0x158] sm:$0xff]
    %v565 = vld [vmem:[#allocation11 + $0x160] sm:$0xff]
    %v566 = vld [vmem:[#allocation11 + $0x168] sm:$0xff]
    %v567 = vld [vmem:[#allocation11 + $0x170] sm:$0xff]
    %v568 = vld [vmem:[#allocation11 + $0x178] sm:$0xff]
    %v569 = vld [vmem:[#allocation11 + $0x180] sm:$0xff]
    %v570 = vld [vmem:[#allocation11 + $0x188] sm:$0xff]
    %v571 = vld [vmem:[#allocation11 + $0x190] sm:$0xff]
    %v572 = vld [vmem:[#allocation11 + $0x198] sm:$0xff]
    %v573 = vld [vmem:[#allocation11 + $0x1a0] sm:$0xff]
    %v574 = vld [vmem:[#allocation11 + $0x1a8] sm:$0xff]
    %v575 = vld [vmem:[#allocation11 + $0x1b0] sm:$0xff]
    %v576 = vld [vmem:[#allocation11 + $0x1b8] sm:$0xff]
    %v577 = vld [vmem:[#allocation11 + $0x1c0] sm:$0xff]
    %v578 = vld [vmem:[#allocation11 + $0x1c8] sm:$0xff]
    %v579 = vld [vmem:[#allocation11 + $0x1d0] sm:$0xff]
    %v580 = vld [vmem:[#allocation11 + $0x1d8] sm:$0xff]
    %v581 = vld [vmem:[#allocation11 + $0x1e0] sm:$0xff]
    %v582 = vld [vmem:[#allocation11 + $0x1e8] sm:$0xff]
    %v583 = vld [vmem:[#allocation11 + $0x1f0] sm:$0xff]
    %v584 = vld [vmem:[#allocation11 + $0x1f8] sm:$0xff]
    %v585 = vld [vmem:[#allocation11 + $0x200] sm:$0xff]
    %v586 = vld [vmem:[#allocation11 + $0x208] sm:$0xff]
    %v587 = vld [vmem:[#allocation11 + $0x210] sm:$0xff]
    %v588 = vld [vmem:[#allocation11 + $0x218] sm:$0xff]
    %v589 = vld [vmem:[#allocation11 + $0x220] sm:$0xff]
    %v590 = vld [vmem:[#allocation11 + $0x228] sm:$0xff]
    %v591 = vld [vmem:[#allocation11 + $0x230] sm:$0xff]
    %v592 = vld [vmem:[#allocation11 + $0x238] sm:$0xff]
    %v593 = vld [vmem:[#allocation11 + $0x240] sm:$0xff]
    %v594 = vld [vmem:[#allocation11 + $0x248] sm:$0xff]
    %v595 = vld [vmem:[#allocation11 + $0x250] sm:$0xff]
    %v596 = vld [vmem:[#allocation11 + $0x258] sm:$0xff]
    %v597 = vld [vmem:[#allocation11 + $0x260] sm:$0xff]
    %v598 = vld [vmem:[#allocation11 + $0x268] sm:$0xff]
    %v599 = vld [vmem:[#allocation11 + $0x270] sm:$0xff]
    %v600 = vld [vmem:[#allocation11 + $0x278] sm:$0xff]
    %v601 = vld [vmem:[#allocation11 + $0x280] sm:$0xff]
    %v602 = vld [vmem:[#allocation11 + $0x288] sm:$0xff]
    %v603 = vld [vmem:[#allocation11 + $0x290] sm:$0xff]
    %v604 = vld [vmem:[#allocation11 + $0x298] sm:$0xff]
    %v605 = vld [vmem:[#allocation11 + $0x2a0] sm:$0xff]
    %v606 = vld [vmem:[#allocation11 + $0x2a8] sm:$0xff]
    %v607 = vld [vmem:[#allocation11 + $0x2b0] sm:$0xff]
    %v608 = vld [vmem:[#allocation11 + $0x2b8] sm:$0xff]
    %v609 = vld [vmem:[#allocation11 + $0x2c0] sm:$0xff]
    %v610 = vld [vmem:[#allocation11 + $0x2c8] sm:$0xff]
    %v611 = vld [vmem:[#allocation11 + $0x2d0] sm:$0xff]
    %v612 = vld [vmem:[#allocation11 + $0x2d8] sm:$0xff]
    %v613 = vld [vmem:[#allocation11 + $0x2e0] sm:$0xff]
    %v614 = vld [vmem:[#allocation11 + $0x2e8] sm:$0xff]
    %v615 = vld [vmem:[#allocation11 + $0x2f0] sm:$0xff]
    %v616 = vld [vmem:[#allocation11 + $0x2f8] sm:$0xff]
    %v617 = vld [vmem:[%s9] sm:$0x7]
    %v619 = vlaneseq
    %v620 = vshrl.u32 %v619, 7
    %v621 = vsub.s32 0, %v620
    %v622 = vrot.slane %v617, %v621
    %v623 = vlaneseq
    %v624 = vshrl.u32 %v623, 7
    %v625 = vsub.s32 1, %v624
    %v626 = vrot.slane %v617, %v625
    %v627 = vlaneseq
    %v628 = vshrl.u32 %v627, 7
    %v629 = vsub.s32 2, %v628
    %v630 = vrot.slane %v617, %v629
    %634 = vmatprep.subr.mxu0 %v522
    %635 = vmatpush1.msra.mxu0 %v521
    %636 = vmatprep.subr.mxu0 %v525
    %637 = vmatpush1.msra.mxu0 %v524
    %638 = vmatprep.subr.mxu0 %v528
    %639 = vmatpush1.msra.mxu0 %v527
    %640 = vmatprep.subr.mxu0 %v531
    %641 = vmatpush1.msra.mxu0 %v530
    %642 = vmatprep.subr.mxu0 %v534
    %643 = vmatpush1.msra.mxu0 %v533
    %644 = vmatprep.subr.mxu0 %v537
    %645 = vmatpush1.msra.mxu0 %v536
    %646 = vmatprep.subr.mxu0 %v540
    %647 = vmatpush1.msra.mxu0 %v539
    %648 = vmatprep.subr.mxu0 %v543
    %649 = vmatpush1.msra.mxu0 %v542
    %650 = vmatprep.subr.mxu0 %v546
    %651 = vmatpush1.msra.mxu0 %v545
    %652 = vmatprep.subr.mxu0 %v549
    %653 = vmatpush1.msra.mxu0 %v548
    %654 = vmatprep.subr.mxu0 %v552
    %655 = vmatpush1.msra.mxu0 %v551
    %656 = vmatprep.subr.mxu0 %v555
    %657 = vmatpush1.msra.mxu0 %v554
    %658 = vmatprep.subr.mxu0 %v558
    %659 = vmatpush1.msra.mxu0 %v557
    %660 = vmatprep.subr.mxu0 %v561
    %661 = vmatpush1.msra.mxu0 %v560
    %662 = vmatprep.subr.mxu0 %v564
    %663 = vmatpush1.msra.mxu0 %v563
    %664 = vmatprep.subr.mxu0 %v567
    %665 = vmatpush1.msra.mxu0 %v566
    %666 = vmatprep.subr.mxu0 %v570
    %667 = vmatpush1.msra.mxu0 %v569
    %668 = vmatprep.subr.mxu0 %v573
    %669 = vmatpush1.msra.mxu0 %v572
    %670 = vmatprep.subr.mxu0 %v576
    %671 = vmatpush1.msra.mxu0 %v575
    %672 = vmatprep.subr.mxu0 %v579
    %673 = vmatpush1.msra.mxu0 %v578
    %674 = vmatprep.subr.mxu0 %v582
    %675 = vmatpush1.msra.mxu0 %v581
    %676 = vmatprep.subr.mxu0 %v585
    %677 = vmatpush1.msra.mxu0 %v584
    %678 = vmatprep.subr.mxu0 %v588
    %679 = vmatpush1.msra.mxu0 %v587
    %680 = vmatprep.subr.mxu0 %v591
    %681 = vmatpush1.msra.mxu0 %v590
    %682 = vmatprep.subr.mxu0 %v594
    %683 = vmatpush1.msra.mxu0 %v593
    %684 = vmatprep.subr.mxu0 %v597
    %685 = vmatpush1.msra.mxu0 %v596
    %686 = vmatprep.subr.mxu0 %v600
    %687 = vmatpush1.msra.mxu0 %v599
    %688 = vmatprep.subr.mxu0 %v603
    %689 = vmatpush1.msra.mxu0 %v602
    %690 = vmatprep.subr.mxu0 %v606
    %691 = vmatpush1.msra.mxu0 %v605
    %692 = vmatprep.subr.mxu0 %v609
    %693 = vmatpush1.msra.mxu0 %v608
    %694 = vmatprep.subr.mxu0 %v612
    %695 = vmatpush1.msra.mxu0 %v611
    %696 = vmatprep.subr.mxu0 %v615
    %697 = vmatpush1.msra.mxu0 %v614
    %698 = vmatprep.mubr.f32.mxu0 %v520
    %699 = vmatmul.mubr.f32.gmra.mrb[0].mxu0 %v519
    %v700 = vpop.f32.mrb[0].mxu0
    %v701 = vadd.f32 %v622, %v700
    %v702 = vpop.f32.mrb[0].mxu0
    %v703 = vadd.f32 %v626, %v702
    %704 = vdwg.mxu0
    %705 = vmatprep.subr.mxu0 0.0
    %706 = vmatpush1.msra.mxu0 %v523
    %707 = vmatprep.subr.mxu0 0.0
    %708 = vmatpush1.msra.mxu0 %v526
    %709 = vmatprep.subr.mxu0 0.0
    %710 = vmatpush1.msra.mxu0 %v529
    %711 = vmatprep.subr.mxu0 0.0
    %712 = vmatpush1.msra.mxu0 %v532
    %713 = vmatprep.subr.mxu0 0.0
    %714 = vmatpush1.msra.mxu0 %v535
    %715 = vmatprep.subr.mxu0 0.0
    %716 = vmatpush1.msra.mxu0 %v538
    %717 = vmatprep.subr.mxu0 0.0
    %718 = vmatpush1.msra.mxu0 %v541
    %719 = vmatprep.subr.mxu0 0.0
    %720 = vmatpush1.msra.mxu0 %v544
    %721 = vmatprep.subr.mxu0 0.0
    %722 = vmatpush1.msra.mxu0 %v547
    %723 = vmatprep.subr.mxu0 0.0
    %724 = vmatpush1.msra.mxu0 %v550
    %725 = vmatprep.subr.mxu0 0.0
    %726 = vmatpush1.msra.mxu0 %v553
    %727 = vmatprep.subr.mxu0 0.0
    %728 = vmatpush1.msra.mxu0 %v556
    %729 = vmatprep.subr.mxu0 0.0
    %730 = vmatpush1.msra.mxu0 %v559
    %731 = vmatprep.subr.mxu0 0.0
    %732 = vmatpush1.msra.mxu0 %v562
    %733 = vmatprep.subr.mxu0 0.0
    %734 = vmatpush1.msra.mxu0 %v565
    %735 = vmatprep.subr.mxu0 0.0
    %736 = vmatpush1.msra.mxu0 %v568
    %737 = vmatprep.subr.mxu0 0.0
    %738 = vmatpush1.msra.mxu0 %v571
    %739 = vmatprep.subr.mxu0 0.0
    %740 = vmatpush1.msra.mxu0 %v574
    %741 = vmatprep.subr.mxu0 0.0
    %742 = vmatpush1.msra.mxu0 %v577
    %743 = vmatprep.subr.mxu0 0.0
    %744 = vmatpush1.msra.mxu0 %v580
    %745 = vmatprep.subr.mxu0 0.0
    %746 = vmatpush1.msra.mxu0 %v583
    %747 = vmatprep.subr.mxu0 0.0
    %748 = vmatpush1.msra.mxu0 %v586
    %749 = vmatprep.subr.mxu0 0.0
    %750 = vmatpush1.msra.mxu0 %v589
    %751 = vmatprep.subr.mxu0 0.0
    %752 = vmatpush1.msra.mxu0 %v592
    %753 = vmatprep.subr.mxu0 0.0
    %754 = vmatpush1.msra.mxu0 %v595
    %755 = vmatprep.subr.mxu0 0.0
    %756 = vmatpush1.msra.mxu0 %v598
    %757 = vmatprep.subr.mxu0 0.0
    %758 = vmatpush1.msra.mxu0 %v601
    %759 = vmatprep.subr.mxu0 0.0
    %760 = vmatpush1.msra.mxu0 %v604
    %761 = vmatprep.subr.mxu0 0.0
    %762 = vmatpush1.msra.mxu0 %v607
    %763 = vmatprep.subr.mxu0 0.0
    %764 = vmatpush1.msra.mxu0 %v610
    %765 = vmatprep.subr.mxu0 0.0
    %766 = vmatpush1.msra.mxu0 %v613
    %767 = vmatprep.subr.mxu0 0.0
    %768 = vmatpush1.msra.mxu0 %v616
    %769 = vmatprep.mubr.f32.mxu0 %v520
    %770 = vmatmul.mubr.f32.gmra.mrb[0].mxu0 %v519
    %v771 = vpop.f32.mrb[0].mxu0
    %v772 = vadd.f32 %v630, %v771
    %v773 = vpop.f32.mrb[0].mxu0
    %774 = vdwg.mxu0
    %v775 = vxor.u32 %v701, 2147483648
    %v776 = vmul.f32 %v775, 1.442695
    %v777 = vpow.pop %v776
    %v778 = vadd.f32 %v777, 1.0
    %v779 = vrcp.pop %v778
    %v780 = vmul.f32 1.0, %v779
    %v781 = vxor.u32 %v703, 2147483648
    %v782 = vmul.f32 %v781, 1.442695
    %v783 = vpow.pop %v782
    %v784 = vadd.f32 %v783, 1.0
    %v785 = vrcp.pop %v784
    %v786 = vmul.f32 1.0, %v785
    %v787 = vld [vmem:[#allocation12] sm:$0xff]
    %v788 = vld [vmem:[#allocation12 + $0x8] sm:$0xff]
    %v789 = vld [vmem:[#allocation12 + $0x10] sm:$0xff]
    %v790 = vld [vmem:[#allocation12 + $0x18] sm:$0xff]
    %v791 = vld [vmem:[#allocation12 + $0x20] sm:$0xff]
    %v792 = vld [vmem:[#allocation12 + $0x28] sm:$0xff]
    %v793 = vld [vmem:[#allocation12 + $0x30] sm:$0xff]
    %v794 = vld [vmem:[#allocation12 + $0x38] sm:$0xff]
    %v795 = vld [vmem:[#allocation12 + $0x40] sm:$0xff]
    %v796 = vld [vmem:[#allocation12 + $0x48] sm:$0xff]
    %v797 = vld [vmem:[#allocation12 + $0x50] sm:$0xff]
    %v798 = vld [vmem:[#allocation12 + $0x58] sm:$0xff]
    %v799 = vld [vmem:[#allocation12 + $0x60] sm:$0xff]
    %v800 = vld [vmem:[#allocation12 + $0x68] sm:$0xff]
    %v801 = vld [vmem:[#allocation12 + $0x70] sm:$0xff]
    %v802 = vld [vmem:[#allocation12 + $0x78] sm:$0xff]
    %v803 = vld [vmem:[%s11] sm:$0x1]
    %v805 = vlaneseq
    %v806 = vshrl.u32 %v805, 7
    %v807 = vsub.s32 0, %v806
    %v808 = vrot.slane %v803, %v807
    %810 = vmatprep.subr.mxu0 0.0
    %811 = vmatpush1.msra.mxu0 %v787
    %812 = vmatprep.subr.mxu0 0.0
    %813 = vmatpush1.msra.mxu0 %v788
    %814 = vmatprep.subr.mxu0 0.0
    %815 = vmatpush1.msra.mxu0 %v789
    %816 = vmatprep.subr.mxu0 0.0
    %817 = vmatpush1.msra.mxu0 %v790
    %818 = vmatprep.subr.mxu0 0.0
    %819 = vmatpush1.msra.mxu0 %v791
    %820 = vmatprep.subr.mxu0 0.0
    %821 = vmatpush1.msra.mxu0 %v792
    %822 = vmatprep.subr.mxu0 0.0
    %823 = vmatpush1.msra.mxu0 %v793
    %824 = vmatprep.subr.mxu0 0.0
    %825 = vmatpush1.msra.mxu0 %v794
    %826 = vmatprep.subr.mxu0 0.0
    %827 = vmatpush1.msra.mxu0 %v795
    %828 = vmatprep.subr.mxu0 0.0
    %829 = vmatpush1.msra.mxu0 %v796
    %830 = vmatprep.subr.mxu0 0.0
    %831 = vmatpush1.msra.mxu0 %v797
    %832 = vmatprep.subr.mxu0 0.0
    %833 = vmatpush1.msra.mxu0 %v798
    %834 = vmatprep.subr.mxu0 0.0
    %835 = vmatpush1.msra.mxu0 %v799
    %836 = vmatprep.subr.mxu0 0.0
    %837 = vmatpush1.msra.mxu0 %v800
    %838 = vmatprep.subr.mxu0 0.0
    %839 = vmatpush1.msra.mxu0 %v801
    %840 = vmatprep.subr.mxu0 0.0
    %841 = vmatpush1.msra.mxu0 %v802
    %842 = vmatprep.subr.mxu0 0.0
    %843 = vmatpush1.msra.mxu0 0.0
    %844 = vmatprep.subr.mxu0 0.0
    %845 = vmatpush1.msra.mxu0 0.0
    %846 = vmatprep.subr.mxu0 0.0
    %847 = vmatpush1.msra.mxu0 0.0
    %848 = vmatprep.subr.mxu0 0.0
    %849 = vmatpush1.msra.mxu0 0.0
    %850 = vmatprep.subr.mxu0 0.0
    %851 = vmatpush1.msra.mxu0 0.0
    %852 = vmatprep.subr.mxu0 0.0
    %853 = vmatpush1.msra.mxu0 0.0
    %854 = vmatprep.subr.mxu0 0.0
    %855 = vmatpush1.msra.mxu0 0.0
    %856 = vmatprep.subr.mxu0 0.0
    %857 = vmatpush1.msra.mxu0 0.0
    %858 = vmatprep.subr.mxu0 0.0
    %859 = vmatpush1.msra.mxu0 0.0
    %860 = vmatprep.subr.mxu0 0.0
    %861 = vmatpush1.msra.mxu0 0.0
    %862 = vmatprep.subr.mxu0 0.0
    %863 = vmatpush1.msra.mxu0 0.0
    %864 = vmatprep.subr.mxu0 0.0
    %865 = vmatpush1.msra.mxu0 0.0
    %866 = vmatprep.subr.mxu0 0.0
    %867 = vmatpush1.msra.mxu0 0.0
    %868 = vmatprep.subr.mxu0 0.0
    %869 = vmatpush1.msra.mxu0 0.0
    %870 = vmatprep.subr.mxu0 0.0
    %871 = vmatpush1.msra.mxu0 0.0
    %872 = vmatprep.subr.mxu0 0.0
    %873 = vmatpush1.msra.mxu0 0.0
    %874 = vmatprep.mubr.f32.mxu0 0.0
    %875 = vmatmul.mubr.f32.gmra.mrb[0].mxu0 %v520
    %v876 = vpop.f32.mrb[0].mxu0
    %v877 = vadd.f32 %v808, %v876
    %v878 = vpop.f32.mrb[0].mxu0
    %879 = vdwg.mxu0
    %v880 = vsub.f32 %v780, 1.0
    %v881 = vmul.f32 %v880, %v877
    %v882 = vadd.f32 %v772, %v881
    %v883 = vtanh.pop %v882
    %v884 = vsub.f32 1.0, %v786
    %v885 = vmul.f32 %v884, %v883
    %v886 = vmul.f32 %v786, %v520
    %v887 = vadd.f32 %v885, %v886
    %888 = vst [vmem:[#allocation14] sm:$0xff] %v887
    %s889 = scalar_lea.vmem %s1, 8
    %v890 = vld [vmem:[%s889] sm:$0xff]
    %s891 = scalar_lea.vmem [#allocation11], 768
    %v892 = vld [vmem:[%s891] sm:$0xff]
    %v893 = vld [vmem:[%s891 + $0x8] sm:$0xff]
    %v894 = vld [vmem:[%s891 + $0x10] sm:$0xff]
    %v895 = vld [vmem:[%s891 + $0x18] sm:$0xff]
    %v896 = vld [vmem:[%s891 + $0x20] sm:$0xff]
    %v897 = vld [vmem:[%s891 + $0x28] sm:$0xff]
    %v898 = vld [vmem:[%s891 + $0x30] sm:$0xff]
    %v899 = vld [vmem:[%s891 + $0x38] sm:$0xff]
    %v900 = vld [vmem:[%s891 + $0x40] sm:$0xff]
    %v901 = vld [vmem:[%s891 + $0x48] sm:$0xff]
    %v902 = vld [vmem:[%s891 + $0x50] sm:$0xff]
    %v903 = vld [vmem:[%s891 + $0x58] sm:$0xff]
    %v904 = vld [vmem:[%s891 + $0x60] sm:$0xff]
    %v905 = vld [vmem:[%s891 + $0x68] sm:$0xff]
    %v906 = vld [vmem:[%s891 + $0x70] sm:$0xff]
    %v907 = vld [vmem:[%s891 + $0x78] sm:$0xff]
    %v908 = vld [vmem:[%s891 + $0x80] sm:$0xff]
    %v909 = vld [vmem:[%s891 + $0x88] sm:$0xff]
    %v910 = vld [vmem:[%s891 + $0x90] sm:$0xff]
    %v911 = vld [vmem:[%s891 + $0x98] sm:$0xff]
    %v912 = vld [vmem:[%s891 + $0xa0] sm:$0xff]
    %v913 = vld [vmem:[%s891 + $0xa8] sm:$0xff]
    %v914 = vld [vmem:[%s891 + $0xb0] sm:$0xff]
    %v915 = vld [vmem:[%s891 + $0xb8] sm:$0xff]
    %v916 = vld [vmem:[%s891 + $0xc0] sm:$0xff]
    %v917 = vld [vmem:[%s891 + $0xc8] sm:$0xff]
    %v918 = vld [vmem:[%s891 + $0xd0] sm:$0xff]
    %v919 = vld [vmem:[%s891 + $0xd8] sm:$0xff]
    %v920 = vld [vmem:[%s891 + $0xe0] sm:$0xff]
    %v921 = vld [vmem:[%s891 + $0xe8] sm:$0xff]
    %v922 = vld [vmem:[%s891 + $0xf0] sm:$0xff]
    %v923 = vld [vmem:[%s891 + $0xf8] sm:$0xff]
    %v924 = vld [vmem:[%s891 + $0x100] sm:$0xff]
    %v925 = vld [vmem:[%s891 + $0x108] sm:$0xff]
    %v926 = vld [vmem:[%s891 + $0x110] sm:$0xff]
    %v927 = vld [vmem:[%s891 + $0x118] sm:$0xff]
    %v928 = vld [vmem:[%s891 + $0x120] sm:$0xff]
    %v929 = vld [vmem:[%s891 + $0x128] sm:$0xff]
    %v930 = vld [vmem:[%s891 + $0x130] sm:$0xff]
    %v931 = vld [vmem:[%s891 + $0x138] sm:$0xff]
    %v932 = vld [vmem:[%s891 + $0x140] sm:$0xff]
    %v933 = vld [vmem:[%s891 + $0x148] sm:$0xff]
    %v934 = vld [vmem:[%s891 + $0x150] sm:$0xff]
    %v935 = vld [vmem:[%s891 + $0x158] sm:$0xff]
    %v936 = vld [vmem:[%s891 + $0x160] sm:$0xff]
    %v937 = vld [vmem:[%s891 + $0x168] sm:$0xff]
    %v938 = vld [vmem:[%s891 + $0x170] sm:$0xff]
    %v939 = vld [vmem:[%s891 + $0x178] sm:$0xff]
    %v940 = vld [vmem:[%s891 + $0x180] sm:$0xff]
    %v941 = vld [vmem:[%s891 + $0x188] sm:$0xff]
    %v942 = vld [vmem:[%s891 + $0x190] sm:$0xff]
    %v943 = vld [vmem:[%s891 + $0x198] sm:$0xff]
    %v944 = vld [vmem:[%s891 + $0x1a0] sm:$0xff]
    %v945 = vld [vmem:[%s891 + $0x1a8] sm:$0xff]
    %v946 = vld [vmem:[%s891 + $0x1b0] sm:$0xff]
    %v947 = vld [vmem:[%s891 + $0x1b8] sm:$0xff]
    %v948 = vld [vmem:[%s891 + $0x1c0] sm:$0xff]
    %v949 = vld [vmem:[%s891 + $0x1c8] sm:$0xff]
    %v950 = vld [vmem:[%s891 + $0x1d0] sm:$0xff]
    %v951 = vld [vmem:[%s891 + $0x1d8] sm:$0xff]
    %v952 = vld [vmem:[%s891 + $0x1e0] sm:$0xff]
    %v953 = vld [vmem:[%s891 + $0x1e8] sm:$0xff]
    %v954 = vld [vmem:[%s891 + $0x1f0] sm:$0xff]
    %v955 = vld [vmem:[%s891 + $0x1f8] sm:$0xff]
    %v956 = vld [vmem:[%s891 + $0x200] sm:$0xff]
    %v957 = vld [vmem:[%s891 + $0x208] sm:$0xff]
    %v958 = vld [vmem:[%s891 + $0x210] sm:$0xff]
    %v959 = vld [vmem:[%s891 + $0x218] sm:$0xff]
    %v960 = vld [vmem:[%s891 + $0x220] sm:$0xff]
    %v961 = vld [vmem:[%s891 + $0x228] sm:$0xff]
    %v962 = vld [vmem:[%s891 + $0x230] sm:$0xff]
    %v963 = vld [vmem:[%s891 + $0x238] sm:$0xff]
    %v964 = vld [vmem:[%s891 + $0x240] sm:$0xff]
    %v965 = vld [vmem:[%s891 + $0x248] sm:$0xff]
    %v966 = vld [vmem:[%s891 + $0x250] sm:$0xff]
    %v967 = vld [vmem:[%s891 + $0x258] sm:$0xff]
    %v968 = vld [vmem:[%s891 + $0x260] sm:$0xff]
    %v969 = vld [vmem:[%s891 + $0x268] sm:$0xff]
    %v970 = vld [vmem:[%s891 + $0x270] sm:$0xff]
    %v971 = vld [vmem:[%s891 + $0x278] sm:$0xff]
    %v972 = vld [vmem:[%s891 + $0x280] sm:$0xff]
    %v973 = vld [vmem:[%s891 + $0x288] sm:$0xff]
    %v974 = vld [vmem:[%s891 + $0x290] sm:$0xff]
    %v975 = vld [vmem:[%s891 + $0x298] sm:$0xff]
    %v976 = vld [vmem:[%s891 + $0x2a0] sm:$0xff]
    %v977 = vld [vmem:[%s891 + $0x2a8] sm:$0xff]
    %v978 = vld [vmem:[%s891 + $0x2b0] sm:$0xff]
    %v979 = vld [vmem:[%s891 + $0x2b8] sm:$0xff]
    %v980 = vld [vmem:[%s891 + $0x2c0] sm:$0xff]
    %v981 = vld [vmem:[%s891 + $0x2c8] sm:$0xff]
    %v982 = vld [vmem:[%s891 + $0x2d0] sm:$0xff]
    %v983 = vld [vmem:[%s891 + $0x2d8] sm:$0xff]
    %v984 = vld [vmem:[%s891 + $0x2e0] sm:$0xff]
    %v985 = vld [vmem:[%s891 + $0x2e8] sm:$0xff]
    %v986 = vld [vmem:[%s891 + $0x2f0] sm:$0xff]
    %v987 = vld [vmem:[%s891 + $0x2f8] sm:$0xff]
    %s988 = scalar_lea.vmem %s9, 3
    %v989 = vld [vmem:[%s988] sm:$0x7]
    %v991 = vlaneseq
    %v992 = vshrl.u32 %v991, 7
    %v993 = vsub.s32 0, %v992
    %v994 = vrot.slane %v989, %v993
    %v995 = vlaneseq
    %v996 = vshrl.u32 %v995, 7
    %v997 = vsub.s32 1, %v996
    %v998 = vrot.slane %v989, %v997
    %v999 = vlaneseq
    %v1000 = vshrl.u32 %v999, 7
    %v1001 = vsub.s32 2, %v1000
    %v1002 = vrot.slane %v989, %v1001
    %1006 = vmatprep.subr.mxu0 %v893
    %1007 = vmatpush1.msra.mxu0 %v892
    %1008 = vmatprep.subr.mxu0 %v896
    %1009 = vmatpush1.msra.mxu0 %v895
    %1010 = vmatprep.subr.mxu0 %v899
    %1011 = vmatpush1.msra.mxu0 %v898
    %1012 = vmatprep.subr.mxu0 %v902
    %1013 = vmatpush1.msra.mxu0 %v901
    %1014 = vmatprep.subr.mxu0 %v905
    %1015 = vmatpush1.msra.mxu0 %v904
    %1016 = vmatprep.subr.mxu0 %v908
    %1017 = vmatpush1.msra.mxu0 %v907
    %1018 = vmatprep.subr.mxu0 %v911
    %1019 = vmatpush1.msra.mxu0 %v910
    %1020 = vmatprep.subr.mxu0 %v914
    %1021 = vmatpush1.msra.mxu0 %v913
    %1022 = vmatprep.subr.mxu0 %v917
    %1023 = vmatpush1.msra.mxu0 %v916
    %1024 = vmatprep.subr.mxu0 %v920
    %1025 = vmatpush1.msra.mxu0 %v919
    %1026 = vmatprep.subr.mxu0 %v923
    %1027 = vmatpush1.msra.mxu0 %v922
    %1028 = vmatprep.subr.mxu0 %v926
    %1029 = vmatpush1.msra.mxu0 %v925
    %1030 = vmatprep.subr.mxu0 %v929
    %1031 = vmatpush1.msra.mxu0 %v928
    %1032 = vmatprep.subr.mxu0 %v932
    %1033 = vmatpush1.msra.mxu0 %v931
    %1034 = vmatprep.subr.mxu0 %v935
    %1035 = vmatpush1.msra.mxu0 %v934
    %1036 = vmatprep.subr.mxu0 %v938
    %1037 = vmatpush1.msra.mxu0 %v937
    %1038 = vmatprep.subr.mxu0 %v941
    %1039 = vmatpush1.msra.mxu0 %v940
    %1040 = vmatprep.subr.mxu0 %v944
    %1041 = vmatpush1.msra.mxu0 %v943
    %1042 = vmatprep.subr.mxu0 %v947
    %1043 = vmatpush1.msra.mxu0 %v946
    %1044 = vmatprep.subr.mxu0 %v950
    %1045 = vmatpush1.msra.mxu0 %v949
    %1046 = vmatprep.subr.mxu0 %v953
    %1047 = vmatpush1.msra.mxu0 %v952
    %1048 = vmatprep.subr.mxu0 %v956
    %1049 = vmatpush1.msra.mxu0 %v955
    %1050 = vmatprep.subr.mxu0 %v959
    %1051 = vmatpush1.msra.mxu0 %v958
    %1052 = vmatprep.subr.mxu0 %v962
    %1053 = vmatpush1.msra.mxu0 %v961
    %1054 = vmatprep.subr.mxu0 %v965
    %1055 = vmatpush1.msra.mxu0 %v964
    %1056 = vmatprep.subr.mxu0 %v968
    %1057 = vmatpush1.msra.mxu0 %v967
    %1058 = vmatprep.subr.mxu0 %v971
    %1059 = vmatpush1.msra.mxu0 %v970
    %1060 = vmatprep.subr.mxu0 %v974
    %1061 = vmatpush1.msra.mxu0 %v973
    %1062 = vmatprep.subr.mxu0 %v977
    %1063 = vmatpush1.msra.mxu0 %v976
    %1064 = vmatprep.subr.mxu0 %v980
    %1065 = vmatpush1.msra.mxu0 %v979
    %1066 = vmatprep.subr.mxu0 %v983
    %1067 = vmatpush1.msra.mxu0 %v982
    %1068 = vmatprep.subr.mxu0 %v986
    %1069 = vmatpush1.msra.mxu0 %v985
    %1070 = vmatprep.mubr.f32.mxu0 %v890
    %1071 = vmatmul.mubr.f32.gmra.mrb[0].mxu0 %v887
    %v1072 = vpop.f32.mrb[0].mxu0
    %v1073 = vadd.f32 %v994, %v1072
    %v1074 = vpop.f32.mrb[0].mxu0
    %v1075 = vadd.f32 %v998, %v1074
    %1076 = vdwg.mxu0
    %1077 = vmatprep.subr.mxu0 0.0
    %1078 = vmatpush1.msra.mxu0 %v894
    %1079 = vmatprep.subr.mxu0 0.0
    %1080 = vmatpush1.msra.mxu0 %v897
    %1081 = vmatprep.subr.mxu0 0.0
    %1082 = vmatpush1.msra.mxu0 %v900
    %1083 = vmatprep.subr.mxu0 0.0
    %1084 = vmatpush1.msra.mxu0 %v903
    %1085 = vmatprep.subr.mxu0 0.0
    %1086 = vmatpush1.msra.mxu0 %v906
    %1087 = vmatprep.subr.mxu0 0.0
    %1088 = vmatpush1.msra.mxu0 %v909
    %1089 = vmatprep.subr.mxu0 0.0
    %1090 = vmatpush1.msra.mxu0 %v912
    %1091 = vmatprep.subr.mxu0 0.0
    %1092 = vmatpush1.msra.mxu0 %v915
    %1093 = vmatprep.subr.mxu0 0.0
    %1094 = vmatpush1.msra.mxu0 %v918
    %1095 = vmatprep.subr.mxu0 0.0
    %1096 = vmatpush1.msra.mxu0 %v921
    %1097 = vmatprep.subr.mxu0 0.0
    %1098 = vmatpush1.msra.mxu0 %v924
    %1099 = vmatprep.subr.mxu0 0.0
    %1100 = vmatpush1.msra.mxu0 %v927
    %1101 = vmatprep.subr.mxu0 0.0
    %1102 = vmatpush1.msra.mxu0 %v930
    %1103 = vmatprep.subr.mxu0 0.0
    %1104 = vmatpush1.msra.mxu0 %v933
    %1105 = vmatprep.subr.mxu0 0.0
    %1106 = vmatpush1.msra.mxu0 %v936
    %1107 = vmatprep.subr.mxu0 0.0
    %1108 = vmatpush1.msra.mxu0 %v939
    %1109 = vmatprep.subr.mxu0 0.0
    %1110 = vmatpush1.msra.mxu0 %v942
    %1111 = vmatprep.subr.mxu0 0.0
    %1112 = vmatpush1.msra.mxu0 %v945
    %1113 = vmatprep.subr.mxu0 0.0
    %1114 = vmatpush1.msra.mxu0 %v948
    %1115 = vmatprep.subr.mxu0 0.0
    %1116 = vmatpush1.msra.mxu0 %v951
    %1117 = vmatprep.subr.mxu0 0.0
    %1118 = vmatpush1.msra.mxu0 %v954
    %1119 = vmatprep.subr.mxu0 0.0
    %1120 = vmatpush1.msra.mxu0 %v957
    %1121 = vmatprep.subr.mxu0 0.0
    %1122 = vmatpush1.msra.mxu0 %v960
    %1123 = vmatprep.subr.mxu0 0.0
    %1124 = vmatpush1.msra.mxu0 %v963
    %1125 = vmatprep.subr.mxu0 0.0
    %1126 = vmatpush1.msra.mxu0 %v966
    %1127 = vmatprep.subr.mxu0 0.0
    %1128 = vmatpush1.msra.mxu0 %v969
    %1129 = vmatprep.subr.mxu0 0.0
    %1130 = vmatpush1.msra.mxu0 %v972
    %1131 = vmatprep.subr.mxu0 0.0
    %1132 = vmatpush1.msra.mxu0 %v975
    %1133 = vmatprep.subr.mxu0 0.0
    %1134 = vmatpush1.msra.mxu0 %v978
    %1135 = vmatprep.subr.mxu0 0.0
    %1136 = vmatpush1.msra.mxu0 %v981
    %1137 = vmatprep.subr.mxu0 0.0
    %1138 = vmatpush1.msra.mxu0 %v984
    %1139 = vmatprep.subr.mxu0 0.0
    %1140 = vmatpush1.msra.mxu0 %v987
    %1141 = vmatprep.mubr.f32.mxu0 %v890
    %1142 = vmatmul.mubr.f32.gmra.mrb[0].mxu0 %v887
    %v1143 = vpop.f32.mrb[0].mxu0
    %v1144 = vadd.f32 %v1002, %v1143
    %v1145 = vpop.f32.mrb[0].mxu0
    %1146 = vdwg.mxu0
    %v1147 = vxor.u32 %v1073, 2147483648
    %v1148 = vmul.f32 %v1147, 1.442695
    %v1149 = vpow.pop %v1148
    %v1150 = vadd.f32 %v1149, 1.0
    %v1151 = vrcp.pop %v1150
    %v1152 = vmul.f32 1.0, %v1151
    %v1153 = vxor.u32 %v1075, 2147483648
    %v1154 = vmul.f32 %v1153, 1.442695
    %v1155 = vpow.pop %v1154
    %v1156 = vadd.f32 %v1155, 1.0
    %v1157 = vrcp.pop %v1156
    %v1158 = vmul.f32 1.0, %v1157
    %s1159 = scalar_lea.vmem [#allocation12], 128
    %v1160 = vld [vmem:[%s1159] sm:$0xff]
    %v1161 = vld [vmem:[%s1159 + $0x8] sm:$0xff]
    %v1162 = vld [vmem:[%s1159 + $0x10] sm:$0xff]
    %v1163 = vld [vmem:[%s1159 + $0x18] sm:$0xff]
    %v1164 = vld [vmem:[%s1159 + $0x20] sm:$0xff]
    %v1165 = vld [vmem:[%s1159 + $0x28] sm:$0xff]
    %v1166 = vld [vmem:[%s1159 + $0x30] sm:$0xff]
    %v1167 = vld [vmem:[%s1159 + $0x38] sm:$0xff]
    %v1168 = vld [vmem:[%s1159 + $0x40] sm:$0xff]
    %v1169 = vld [vmem:[%s1159 + $0x48] sm:$0xff]
    %v1170 = vld [vmem:[%s1159 + $0x50] sm:$0xff]
    %v1171 = vld [vmem:[%s1159 + $0x58] sm:$0xff]
    %v1172 = vld [vmem:[%s1159 + $0x60] sm:$0xff]
    %v1173 = vld [vmem:[%s1159 + $0x68] sm:$0xff]
    %v1174 = vld [vmem:[%s1159 + $0x70] sm:$0xff]
    %v1175 = vld [vmem:[%s1159 + $0x78] sm:$0xff]
    %s1176 = scalar_lea.vmem %s11, 1
    %v1177 = vld [vmem:[%s1176] sm:$0x1]
    %v1179 = vlaneseq
    %v1180 = vshrl.u32 %v1179, 7
    %v1181 = vsub.s32 0, %v1180
    %v1182 = vrot.slane %v1177, %v1181
    %1184 = vmatprep.subr.mxu0 0.0
    %1185 = vmatpush1.msra.mxu0 %v1160
    %1186 = vmatprep.subr.mxu0 0.0
    %1187 = vmatpush1.msra.mxu0 %v1161
    %1188 = vmatprep.subr.mxu0 0.0
    %1189 = vmatpush1.msra.mxu0 %v1162
    %1190 = vmatprep.subr.mxu0 0.0
    %1191 = vmatpush1.msra.mxu0 %v1163
    %1192 = vmatprep.subr.mxu0 0.0
    %1193 = vmatpush1.msra.mxu0 %v1164
    %1194 = vmatprep.subr.mxu0 0.0
    %1195 = vmatpush1.msra.mxu0 %v1165
    %1196 = vmatprep.subr.mxu0 0.0
    %1197 = vmatpush1.msra.mxu0 %v1166
    %1198 = vmatprep.subr.mxu0 0.0
    %1199 = vmatpush1.msra.mxu0 %v1167
    %1200 = vmatprep.subr.mxu0 0.0
    %1201 = vmatpush1.msra.mxu0 %v1168
    %1202 = vmatprep.subr.mxu0 0.0
    %1203 = vmatpush1.msra.mxu0 %v1169
    %1204 = vmatprep.subr.mxu0 0.0
    %1205 = vmatpush1.msra.mxu0 %v1170
    %1206 = vmatprep.subr.mxu0 0.0
    %1207 = vmatpush1.msra.mxu0 %v1171
    %1208 = vmatprep.subr.mxu0 0.0
    %1209 = vmatpush1.msra.mxu0 %v1172
    %1210 = vmatprep.subr.mxu0 0.0
    %1211 = vmatpush1.msra.mxu0 %v1173
    %1212 = vmatprep.subr.mxu0 0.0
    %1213 = vmatpush1.msra.mxu0 %v1174
    %1214 = vmatprep.subr.mxu0 0.0
    %1215 = vmatpush1.msra.mxu0 %v1175
    %1216 = vmatprep.subr.mxu0 0.0
    %1217 = vmatpush1.msra.mxu0 0.0
    %1218 = vmatprep.subr.mxu0 0.0
    %1219 = vmatpush1.msra.mxu0 0.0
    %1220 = vmatprep.subr.mxu0 0.0
    %1221 = vmatpush1.msra.mxu0 0.0
    %1222 = vmatprep.subr.mxu0 0.0
    %1223 = vmatpush1.msra.mxu0 0.0
    %1224 = vmatprep.subr.mxu0 0.0
    %1225 = vmatpush1.msra.mxu0 0.0
    %1226 = vmatprep.subr.mxu0 0.0
    %1227 = vmatpush1.msra.mxu0 0.0
    %1228 = vmatprep.subr.mxu0 0.0
    %1229 = vmatpush1.msra.mxu0 0.0
    %1230 = vmatprep.subr.mxu0 0.0
    %1231 = vmatpush1.msra.mxu0 0.0
    %1232 = vmatprep.subr.mxu0 0.0
    %1233 = vmatpush1.msra.mxu0 0.0
    %1234 = vmatprep.subr.mxu0 0.0
    %1235 = vmatpush1.msra.mxu0 0.0
    %1236 = vmatprep.subr.mxu0 0.0
    %1237 = vmatpush1.msra.mxu0 0.0
    %1238 = vmatprep.subr.mxu0 0.0
    %1239 = vmatpush1.msra.mxu0 0.0
    %1240 = vmatprep.subr.mxu0 0.0
    %1241 = vmatpush1.msra.mxu0 0.0
    %1242 = vmatprep.subr.mxu0 0.0
    %1243 = vmatpush1.msra.mxu0 0.0
    %1244 = vmatprep.subr.mxu0 0.0
    %1245 = vmatpush1.msra.mxu0 0.0
    %1246 = vmatprep.subr.mxu0 0.0
    %1247 = vmatpush1.msra.mxu0 0.0
    %1248 = vmatprep.mubr.f32.mxu0 0.0
    %1249 = vmatmul.mubr.f32.gmra.mrb[0].mxu0 %v890
    %v1250 = vpop.f32.mrb[0].mxu0
    %v1251 = vadd.f32 %v1182, %v1250
    %v1252 = vpop.f32.mrb[0].mxu0
    %1253 = vdwg.mxu0
    %v1254 = vsub.f32 %v1152, 1.0
    %v1255 = vmul.f32 %v1254, %v1251
    %v1256 = vadd.f32 %v1144, %v1255
    %v1257 = vtanh.pop %v1256
    %v1258 = vsub.f32 1.0, %v1158
    %v1259 = vmul.f32 %v1258, %v1257
    %v1260 = vmul.f32 %v1158, %v890
    %v1261 = vadd.f32 %v1259, %v1260
    %s1262 = scalar_lea.vmem [#allocation14], 8
    %1263 = vst [vmem:[%s1262] sm:$0xff] %v1261
    %v1264 = vld [vmem:[%s12] sm:$0x1]
    %v1266 = vlaneseq
    %v1267 = vshrl.u32 %v1266, 7
    %v1268 = vsub.s32 0, %v1267
    %v1269 = vrot.slane %v1264, %v1268
    %v1271 = vmul.f32 %v1261, %v1269
    %1272 = vadd.xlane.f32.xlu0 %v1271
    %v1273 = vpop.xlane.xlu0 %1272
    %v1274 = vld [vmem:[#allocation2] sm:$0x1]
    %v1276 = vlaneseq
    %v1277 = vshrl.u32 %v1276, 7
    %v1278 = vsub.s32 0, %v1277
    %v1279 = vrot.slane %v1274, %v1278
    %v1281 = vadd.f32 %v1273, %v1279
    %v1282 = vmax.f32 %v1281, 0.0
    %vm1283 = vcmask 7168
    %1284 = vst.msk [vmem:[%s14] sm:$0xff] %vm1283, %v1282
    // Predicated region
    $region82: #{attn_decoder_gru_forward.1} parent=1 // pred_check
      _
    $region83: #{attn_decoder_gru_forward.1} parent=1 // pred_check_branch
      %1286 = sbr.rel (0) target = $region85
    $region84: #{attn_decoder_gru_forward.1} parent=1 // pred_region
      _
    $region85: #{attn_decoder_gru_forward.1} parent=1 // pred_fallthru
      _
    // Predicated region
    $region86: #{attn_decoder_gru_forward.1} parent=1 // pred_check
      _
    $region87: #{attn_decoder_gru_forward.1} parent=1 // pred_check_branch
      %1288 = sbr.rel (0) target = $region89
    $region88: #{attn_decoder_gru_forward.1} parent=1 // pred_region
      %s1290 = ssub.s32 256, 256
      %1291 = vsyncadd [#allocation5], %s1290
      %s1292 = sshll.u32 [#allocation14], 4
      %s1293 = int_to_ptr.vmem [resolvable:$true] %s1292
      %1298 = dma.vmem_to_hbm [thread:$0]  %s1293, 256, %s15, [#allocation5], 128, 128, 8
    $region89: #{attn_decoder_gru_forward.1} parent=1 // pred_fallthru
      _
    // Predicated region
    $region90: #{attn_decoder_gru_forward.1} parent=1 // pred_check
      _
    $region91: #{attn_decoder_gru_forward.1} parent=1 // pred_check_branch
      %1300 = sbr.rel (0) target = $region93
    $region92: #{attn_decoder_gru_forward.1} parent=1 // pred_region
      %s1302 = ssub.s32 128, 128
      %1303 = vsyncadd [#allocation16], %s1302
      %s1305 = sshll.u32 [#allocation15], 4
      %s1306 = int_to_ptr.vmem [resolvable:$true] %s1305
      %1308 = dma.vmem_to_hbm [thread:$0]  %s1306, 128, %s16, [#allocation16]
    $region93: #{attn_decoder_gru_forward.1} parent=1 // pred_fallthru
      _
    // Predicated region
    $region94: #{attn_decoder_gru_forward.1} parent=1 // pred_check
      _
    $region95: #{attn_decoder_gru_forward.1} parent=1 // pred_check_branch
      %1310 = sbr.rel (0) target = $region97
    $region96: #{attn_decoder_gru_forward.1} parent=1 // pred_region
      _
    $region97: #{attn_decoder_gru_forward.1} parent=1 // pred_fallthru
      _
    // Predicated region
    $region98: #{attn_decoder_gru_forward.1} parent=1 // pred_check
      _
    $region99: #{attn_decoder_gru_forward.1} parent=1 // pred_check_branch
      %1312 = sbr.rel (0) target = $region101
    $region100: #{attn_decoder_gru_forward.1} parent=1 // pred_region
      %1313 = dma.done [#allocation5], 256
    $region101: #{attn_decoder_gru_forward.1} parent=1 // pred_fallthru
      _
    // Predicated region
    $region102: #{attn_decoder_gru_forward.1} parent=1 // pred_check
      _
    $region103: #{attn_decoder_gru_forward.1} parent=1 // pred_check_branch
      %1315 = sbr.rel (0) target = $region105
    $region104: #{attn_decoder_gru_forward.1} parent=1 // pred_region
      %1316 = dma.done [#allocation16], 128
    $region105: #{attn_decoder_gru_forward.1} parent=1 // pred_fallthru
      _
    %1317 = vsyncpa [#allocation4], 1
    %1318 = vsyncpa [#allocation7], 1
    %1319 = vsyncpa [#allocation10], 1
    %1320 = vsyncpa [#allocation13], 1
    %1321 = vsyncpa [#allocation5], 1
    %1322 = vsyncpa [#allocation16], 1

</llo_original>
